<compile_context>
chip_gen: v7x
topology: tpu7x:2x2x1
jax: 0.10.0
libtpu: 0.0.40
codegen_flags: <defaults>
</compile_context>

<pallas_src>
import jax
import jax.numpy as jnp
from jax.experimental import pallas as pl
from jax.experimental.pallas import tpu as pltpu

IN_DIM = 512
HID_DIM = 512
OUT_DIM = 10
OUT_PAD = 128          # lane-aligned padded output width


def _round_up(n, m):
    return ((n + m - 1) // m) * m


def _choose_tb(B):
    """Bucketed batch-tile choice (bounds recompiles, keeps >=2 grid steps
    for large B so megacore/parallel sharding has work on both cores)."""
    if B <= 256:
        return max(16, min(256, pl.next_power_of_2(max(B, 1))))
    if B < 1024:
        return 256
    return 512


def _mlp_kernel(x_ref, w1_ref, b1_ref, w2_ref, b2_ref, w3_ref, b3_ref, o_ref):
    # In-kernel f32 -> bf16 cast of the activations (VPU work, hidden under MXU).
    x = x_ref[...].astype(jnp.bfloat16)
    # Layer 1: Linear(512, 512) + ReLU (bf16 operands, f32 accumulate/epilogue)
    h = jnp.dot(x, w1_ref[...], preferred_element_type=jnp.float32)
    h = jnp.maximum(h + b1_ref[...], 0.0)
    # Layer 2: Linear(512, 512) + ReLU
    h = jnp.dot(h.astype(jnp.bfloat16), w2_ref[...],
                preferred_element_type=jnp.float32)
    h = jnp.maximum(h + b2_ref[...], 0.0)
    # Layer 3: Linear(512, 10), zero-padded to 128 lane-dense columns
    o = jnp.dot(h.astype(jnp.bfloat16), w3_ref[...],
                preferred_element_type=jnp.float32)
    o_ref[...] = (o + b3_ref[...]).astype(o_ref.dtype)   # single bf16 store


def prepare_params(params):
    """One-time parameter prep (bf16 cast, w3/b3 padding, bias reshapes).

    Runs once at init / param-update time, NOT on the forward path.
    """
    w3p = jnp.zeros((HID_DIM, OUT_PAD), jnp.float32).at[:, :OUT_DIM].set(
        params["w3"])
    b3p = jnp.zeros((OUT_PAD,), jnp.float32).at[:OUT_DIM].set(params["b3"])
    return {
        "w1": params["w1"].astype(jnp.bfloat16),
        "w2": params["w2"].astype(jnp.bfloat16),
        "w3": w3p.astype(jnp.bfloat16),
        # Biases kept in f32 (added to the f32 accumulator), as (1, N) rows.
        "b1": params["b1"].reshape(1, HID_DIM).astype(jnp.float32),
        "b2": params["b2"].reshape(1, HID_DIM).astype(jnp.float32),
        "b3": b3p.reshape(1, OUT_PAD).astype(jnp.float32),
    }


def label_predictor_forward(x, prepared):
    """x: (B, 512) float32. prepared: output of prepare_params().

    Returns (B, 10) bf16 logits.
    """
    B = x.shape[0]

    TB = _choose_tb(B)
    Bp = _round_up(B, TB)          # TB is always a multiple of 16
    if Bp != B:
        x = jnp.pad(x, ((0, Bp - B), (0, 0)))

    grid = (Bp // TB,)
    resident = lambda shape: pl.BlockSpec(shape, lambda i: (0, 0))

    out_padded = pl.pallas_call(
        _mlp_kernel,
        out_shape=jax.ShapeDtypeStruct((Bp, OUT_PAD), jnp.bfloat16),
        grid=grid,
        in_specs=[
            pl.BlockSpec((TB, IN_DIM), lambda i: (i, 0)),   # x (f32, batch tiled)
            resident((IN_DIM, HID_DIM)),                    # w1 (bf16)
            resident((1, HID_DIM)),                         # b1 (f32)
            resident((HID_DIM, HID_DIM)),                   # w2 (bf16)
            resident((1, HID_DIM)),                         # b2 (f32)
            resident((HID_DIM, OUT_PAD)),                   # w3 (bf16, padded)
            resident((1, OUT_PAD)),                         # b3 (f32, padded)
        ],
        out_specs=pl.BlockSpec((TB, OUT_PAD), lambda i: (i, 0)),
        compiler_params=pltpu.CompilerParams(
            dimension_semantics=("parallel",)),
    )(x, prepared["w1"], prepared["b1"], prepared["w2"], prepared["b2"],
      prepared["w3"], prepared["b3"])

    return out_padded[:B, :OUT_DIM]


def init_params(key):
    """Deterministic synthetic init matching the PyTorch module's shapes."""
    k1, k2, k3, k4, k5, k6 = jax.random.split(key, 6)
    # Stored as (in_features, out_features); scaled roughly like PyTorch's
    # default uniform(-1/sqrt(fan_in), 1/sqrt(fan_in)).
    s = 1.0 / jnp.sqrt(jnp.float32(IN_DIM))
    return {
        "w1": jax.random.uniform(k1, (IN_DIM, HID_DIM), jnp.float32, -s, s),
        "b1": jax.random.uniform(k2, (HID_DIM,), jnp.float32, -s, s),
        "w2": jax.random.uniform(k3, (HID_DIM, HID_DIM), jnp.float32, -s, s),
        "b2": jax.random.uniform(k4, (HID_DIM,), jnp.float32, -s, s),
        "w3": jax.random.uniform(k5, (HID_DIM, OUT_DIM), jnp.float32, -s, s),
        "b3": jax.random.uniform(k6, (OUT_DIM,), jnp.float32, -s, s),
    }


def _reference_forward_bf16(x, params):
    """Reference matching the kernel's numerics (bf16 operands, f32 accum)."""
    w1 = params["w1"].astype(jnp.bfloat16)
    w2 = params["w2"].astype(jnp.bfloat16)
    w3 = params["w3"].astype(jnp.bfloat16)
    h = jnp.dot(x.astype(jnp.bfloat16), w1,
                preferred_element_type=jnp.float32) + params["b1"]
    h = jnp.maximum(h, 0.0)
    h = jnp.dot(h.astype(jnp.bfloat16), w2,
                preferred_element_type=jnp.float32) + params["b2"]
    h = jnp.maximum(h, 0.0)
    return jnp.dot(h.astype(jnp.bfloat16), w3,
                   preferred_element_type=jnp.float32) + params["b3"]


if __name__ == "__main__":
    key = jax.random.PRNGKey(0)
    kx, kp = jax.random.split(key)

    B = 8  # small batch
    x = jax.random.normal(kx, (B, IN_DIM), jnp.float32)
    params = init_params(kp)
    prepared = prepare_params(params)  # one-time prep, off the forward path

    out = label_predictor_forward(x, prepared)
    out = jax.block_until_ready(out)

    ref = _reference_forward_bf16(x, params)
    assert out.shape == (B, OUT_DIM), out.shape
    assert jnp.allclose(out.astype(jnp.float32), ref, atol=2e-2, rtol=2e-2), \
        "mismatch vs reference"

    print("KERNEL_OK")
</pallas_src>

<mosaic_0001>
module attributes {stable_mosaic.version = 11 : i64} {
  func.func @_mlp_kernel(%arg0: i32, %arg1: memref<16x512xf32, #tpu.memory_space<vmem>>, %arg2: memref<512x512xbf16, #tpu.memory_space<vmem>>, %arg3: memref<1x512xf32, #tpu.memory_space<vmem>>, %arg4: memref<512x512xbf16, #tpu.memory_space<vmem>>, %arg5: memref<1x512xf32, #tpu.memory_space<vmem>>, %arg6: memref<512x128xbf16, #tpu.memory_space<vmem>>, %arg7: memref<1x128xf32, #tpu.memory_space<vmem>>, %arg8: memref<16x128xbf16, #tpu.memory_space<vmem>>) attributes {dimension_semantics = [#tpu.dimension_semantics<parallel>], iteration_bounds = array<i64: 1>, scalar_prefetch = 0 : i64, scratch_operands = 0 : i64, tpu.core_type = #tpu.core_type<tc>, window_params = [{transform_indices = @transform_0, window_bounds = array<i64: 16, 512>}, {pipeline_mode = #tpu.pipeline_mode<synchronous>, transform_indices = @transform_1, window_bounds = array<i64: 512, 512>}, {pipeline_mode = #tpu.pipeline_mode<synchronous>, transform_indices = @transform_2, window_bounds = array<i64: 1, 512>}, {pipeline_mode = #tpu.pipeline_mode<synchronous>, transform_indices = @transform_3, window_bounds = array<i64: 512, 512>}, {pipeline_mode = #tpu.pipeline_mode<synchronous>, transform_indices = @transform_4, window_bounds = array<i64: 1, 512>}, {pipeline_mode = #tpu.pipeline_mode<synchronous>, transform_indices = @transform_5, window_bounds = array<i64: 512, 128>}, {pipeline_mode = #tpu.pipeline_mode<synchronous>, transform_indices = @transform_6, window_bounds = array<i64: 1, 128>}, {transform_indices = @transform_7, window_bounds = array<i64: 16, 128>}]} {
    %c0 = arith.constant 0 : index
    %c0_0 = arith.constant 0 : index
    %0 = vector.load %arg1[%c0, %c0_0] : memref<16x512xf32, #tpu.memory_space<vmem>>, vector<16x512xf32>
    %1 = arith.truncf %0 : vector<16x512xf32> to vector<16x512xbf16>
    %c0_1 = arith.constant 0 : index
    %c0_2 = arith.constant 0 : index
    %2 = vector.load %arg2[%c0_1, %c0_2] : memref<512x512xbf16, #tpu.memory_space<vmem>>, vector<512x512xbf16>
    %cst = arith.constant dense<0.000000e+00> : vector<16x512xf32>
    %3 = tpu.matmul %1, %2, %cst {dimension_numbers = #tpu.dot_dimension_numbers<[1], [0], [0], [1], [0, 0, 1, 1], [], []>} : vector<16x512xbf16>, vector<512x512xbf16>, vector<16x512xf32> -> vector<16x512xf32>
    %c0_3 = arith.constant 0 : index
    %c0_4 = arith.constant 0 : index
    %4 = vector.load %arg3[%c0_3, %c0_4] : memref<1x512xf32, #tpu.memory_space<vmem>>, vector<1x512xf32>
    %5 = vector.broadcast %4 : vector<1x512xf32> to vector<16x512xf32>
    %6 = arith.addf %3, %5 : vector<16x512xf32>
    %cst_5 = arith.constant 0.000000e+00 : f32
    %7 = vector.broadcast %cst_5 : f32 to vector<16x512xf32>
    %8 = arith.maximumf %6, %7 : vector<16x512xf32>
    %9 = arith.truncf %8 : vector<16x512xf32> to vector<16x512xbf16>
    %c0_6 = arith.constant 0 : index
    %c0_7 = arith.constant 0 : index
    %10 = vector.load %arg4[%c0_6, %c0_7] : memref<512x512xbf16, #tpu.memory_space<vmem>>, vector<512x512xbf16>
    %cst_8 = arith.constant dense<0.000000e+00> : vector<16x512xf32>
    %11 = tpu.matmul %9, %10, %cst_8 {dimension_numbers = #tpu.dot_dimension_numbers<[1], [0], [0], [1], [0, 0, 1, 1], [], []>} : vector<16x512xbf16>, vector<512x512xbf16>, vector<16x512xf32> -> vector<16x512xf32>
    %c0_9 = arith.constant 0 : index
    %c0_10 = arith.constant 0 : index
    %12 = vector.load %arg5[%c0_9, %c0_10] : memref<1x512xf32, #tpu.memory_space<vmem>>, vector<1x512xf32>
    %13 = vector.broadcast %12 : vector<1x512xf32> to vector<16x512xf32>
    %14 = arith.addf %11, %13 : vector<16x512xf32>
    %cst_11 = arith.constant 0.000000e+00 : f32
    %15 = vector.broadcast %cst_11 : f32 to vector<16x512xf32>
    %16 = arith.maximumf %14, %15 : vector<16x512xf32>
    %17 = arith.truncf %16 : vector<16x512xf32> to vector<16x512xbf16>
    %c0_12 = arith.constant 0 : index
    %c0_13 = arith.constant 0 : index
    %18 = vector.load %arg6[%c0_12, %c0_13] : memref<512x128xbf16, #tpu.memory_space<vmem>>, vector<512x128xbf16>
    %cst_14 = arith.constant dense<0.000000e+00> : vector<16x128xf32>
    %19 = tpu.matmul %17, %18, %cst_14 {dimension_numbers = #tpu.dot_dimension_numbers<[1], [0], [0], [1], [0, 0, 1, 1], [], []>} : vector<16x512xbf16>, vector<512x128xbf16>, vector<16x128xf32> -> vector<16x128xf32>
    %c0_15 = arith.constant 0 : index
    %c0_16 = arith.constant 0 : index
    %20 = vector.load %arg7[%c0_15, %c0_16] : memref<1x128xf32, #tpu.memory_space<vmem>>, vector<1x128xf32>
    %21 = vector.broadcast %20 : vector<1x128xf32> to vector<16x128xf32>
    %22 = arith.addf %19, %21 : vector<16x128xf32>
    %23 = arith.truncf %22 : vector<16x128xf32> to vector<16x128xbf16>
    %c0_17 = arith.constant 0 : index
    %c0_18 = arith.constant 0 : index
    %24 = vector.load %arg8[%c0_17, %c0_18] : memref<16x128xbf16, #tpu.memory_space<vmem>>, vector<16x128xbf16>
    tpu.vector_store %arg8[%c0_17, %c0_18], %23 {strides = array<i32>} : memref<16x128xbf16, #tpu.memory_space<vmem>>, vector<16x128xbf16>,
    return
  }
  func.func @transform_0(%arg0: i32) -> (i32, i32) {
    %c0_i32 = arith.constant 0 : i32
    %c0_i32_0 = arith.constant 0 : i32
    return %arg0, %c0_i32 : i32, i32
  }
  func.func @transform_1(%arg0: i32) -> (i32, i32) {
    %c0_i32 = arith.constant 0 : i32
    %c0_i32_0 = arith.constant 0 : i32
    %c0_i32_1 = arith.constant 0 : i32
    return %c0_i32, %c0_i32_0 : i32, i32
  }
  func.func @transform_2(%arg0: i32) -> (i32, i32) {
    %c0_i32 = arith.constant 0 : i32
    %c0_i32_0 = arith.constant 0 : i32
    %c0_i32_1 = arith.constant 0 : i32
    return %c0_i32, %c0_i32_0 : i32, i32
  }
  func.func @transform_3(%arg0: i32) -> (i32, i32) {
    %c0_i32 = arith.constant 0 : i32
    %c0_i32_0 = arith.constant 0 : i32
    %c0_i32_1 = arith.constant 0 : i32
    return %c0_i32, %c0_i32_0 : i32, i32
  }
  func.func @transform_4(%arg0: i32) -> (i32, i32) {
    %c0_i32 = arith.constant 0 : i32
    %c0_i32_0 = arith.constant 0 : i32
    %c0_i32_1 = arith.constant 0 : i32
    return %c0_i32, %c0_i32_0 : i32, i32
  }
  func.func @transform_5(%arg0: i32) -> (i32, i32) {
    %c0_i32 = arith.constant 0 : i32
    %c0_i32_0 = arith.constant 0 : i32
    %c0_i32_1 = arith.constant 0 : i32
    return %c0_i32, %c0_i32_0 : i32, i32
  }
  func.func @transform_6(%arg0: i32) -> (i32, i32) {
    %c0_i32 = arith.constant 0 : i32
    %c0_i32_0 = arith.constant 0 : i32
    %c0_i32_1 = arith.constant 0 : i32
    return %c0_i32, %c0_i32_0 : i32, i32
  }
  func.func @transform_7(%arg0: i32) -> (i32, i32) {
    %c0_i32 = arith.constant 0 : i32
    %c0_i32_0 = arith.constant 0 : i32
    return %arg0, %c0_i32 : i32, i32
  }
}

</mosaic_0001>

<llo_original>
// kernel: tpu_custom_call.1
$region0: #{tpu_custom_call.1}
  #allocation0 [shape = 'u32[]', space=smem, size = 0x4, offset = 0x4, fixed_abs, tag = 'smem constant byte address 0x4 - core index']
  #allocation1 [shape = 'u32[144,128]{1,0:T(1,128)}', space=vmem, size = 0x12000, scoped, tag = 'internal scratch']
  %s0 = inlined_call_operand.hbm [shape: f32[16,512], index: 0, kind: input, shape index: {}]
  %s1 = inlined_call_operand.hbm [shape: bf16[512,512], index: 1, kind: input, shape index: {}]
  %s2 = inlined_call_operand.vmem [shape: f32[1,512], index: 2, kind: input, shape index: {}]
  %s3 = inlined_call_operand.hbm [shape: bf16[512,512], index: 3, kind: input, shape index: {}]
  %s4 = inlined_call_operand.vmem [shape: f32[1,512], index: 4, kind: input, shape index: {}]
  %s5 = inlined_call_operand.hbm [shape: bf16[512,128], index: 5, kind: input, shape index: {}]
  %s6 = inlined_call_operand.vmem [shape: f32[1,128], index: 6, kind: input, shape index: {}]
  %s7 = inlined_call_operand.hbm [shape: bf16[16,128], index: 7, kind: output, shape index: {}]
  %s8 = sld [smem:[#allocation0]]
  $region54: #{tpu_custom_call.1} parent=0
    _
  %s10 = ssub.s32 1, %s8
  %s11 = scalar_select 0, %s10, %s8
  $region1: #{tpu_custom_call.1} parent=0
    #allocation2 [shape = 'u8[32768]{0}', space=vmem, size = 0x8000, scoped, tag = 'input window, operand 0, single buffered']
    #allocation3 [shape = 's32[1]{0}', space=sflag, size = 0x4, scoped, tag = 'scoped memory for tpu_custom_call.1']
    #allocation4 [shape = 's32[1]{0}', space=sflag, size = 0x4, scoped, tag = 'scoped memory for tpu_custom_call.1']
    #allocation5 [shape = 'u8[524288]{0}', space=vmem, size = 0x80000, scoped, tag = 'input window, operand 1, single buffered']
    #allocation6 [shape = 's32[1]{0}', space=sflag, size = 0x4, scoped, tag = 'scoped memory for tpu_custom_call.1']
    #allocation7 [shape = 'u8[524288]{0}', space=vmem, size = 0x80000, scoped, tag = 'input window, operand 3, single buffered']
    #allocation8 [shape = 'u8[131072]{0}', space=vmem, size = 0x20000, scoped, tag = 'input window, operand 5, single buffered']
    #allocation9 [shape = 's32[1]{0}', space=sflag, size = 0x4, scoped, tag = 'scoped memory for tpu_custom_call.1']
    #allocation10 [shape = 'u8[4096]{0}', space=vmem, size = 0x1000, scoped, tag = 'output window, operand 0, single buffered']
    %12 = vsyncpa [#allocation3], 0
    %13 = vsyncpa [#allocation6], 0
    %14 = vsyncpa [#allocation9], 0
    %15 = vsyncpa [#allocation4], 0
    // Predicated region
    $region2: #{tpu_custom_call.1} parent=1 // pred_check
      _
    $region3: #{tpu_custom_call.1} parent=1 // pred_check_branch
      %17 = sbr.rel (0) target = $region5
    $region4: #{tpu_custom_call.1} parent=1 // pred_region
      %s19 = ssub.s32 1024, 1024
      %20 = vsyncadd [#allocation3], %s19
      %s21 = sshll.u32 [#allocation2], 4
      %s22 = int_to_ptr.vmem [resolvable:$true] %s21
      %27 = dma.hbm_to_vmem [thread:$0]  %s0, 1024, %s22, [#allocation3], 512, 512, 32
    $region5: #{tpu_custom_call.1} parent=1 // pred_fallthru
      _
    // Predicated region
    $region6: #{tpu_custom_call.1} parent=1 // pred_check
      _
    $region7: #{tpu_custom_call.1} parent=1 // pred_check_branch
      %29 = sbr.rel (0) target = $region9
    $region8: #{tpu_custom_call.1} parent=1 // pred_region
      %s31 = ssub.s32 16384, 16384
      %32 = vsyncadd [#allocation6], %s31
      %s33 = sshll.u32 [#allocation5], 4
      %s34 = int_to_ptr.vmem [resolvable:$true] %s33
      %39 = dma.hbm_to_vmem [thread:$0]  %s1, 16384, %s34, [#allocation6], 256, 256, 16
    $region9: #{tpu_custom_call.1} parent=1 // pred_fallthru
      _
    // Predicated region
    $region10: #{tpu_custom_call.1} parent=1 // pred_check
      _
    $region11: #{tpu_custom_call.1} parent=1 // pred_check_branch
      %41 = sbr.rel (0) target = $region13
    $region12: #{tpu_custom_call.1} parent=1 // pred_region
      _
    $region13: #{tpu_custom_call.1} parent=1 // pred_fallthru
      _
    // Predicated region
    $region14: #{tpu_custom_call.1} parent=1 // pred_check
      _
    $region15: #{tpu_custom_call.1} parent=1 // pred_check_branch
      %43 = sbr.rel (0) target = $region17
    $region16: #{tpu_custom_call.1} parent=1 // pred_region
      %s45 = ssub.s32 16384, 16384
      %46 = vsyncadd [#allocation6], %s45
      %s47 = sshll.u32 [#allocation7], 4
      %s48 = int_to_ptr.vmem [resolvable:$true] %s47
      %53 = dma.hbm_to_vmem [thread:$0]  %s3, 16384, %s48, [#allocation6], 256, 256, 16
    $region17: #{tpu_custom_call.1} parent=1 // pred_fallthru
      _
    // Predicated region
    $region18: #{tpu_custom_call.1} parent=1 // pred_check
      _
    $region19: #{tpu_custom_call.1} parent=1 // pred_check_branch
      %55 = sbr.rel (0) target = $region21
    $region20: #{tpu_custom_call.1} parent=1 // pred_region
      _
    $region21: #{tpu_custom_call.1} parent=1 // pred_fallthru
      _
    // Predicated region
    $region22: #{tpu_custom_call.1} parent=1 // pred_check
      _
    $region23: #{tpu_custom_call.1} parent=1 // pred_check_branch
      %57 = sbr.rel (0) target = $region25
    $region24: #{tpu_custom_call.1} parent=1 // pred_region
      %s59 = ssub.s32 4096, 4096
      %60 = vsyncadd [#allocation9], %s59
      %s61 = sshll.u32 [#allocation8], 4
      %s62 = int_to_ptr.vmem [resolvable:$true] %s61
      %67 = dma.hbm_to_vmem [thread:$0]  %s5, 4096, %s62, [#allocation9], 64, 64, 4
    $region25: #{tpu_custom_call.1} parent=1 // pred_fallthru
      _
    // Predicated region
    $region26: #{tpu_custom_call.1} parent=1 // pred_check
      _
    $region27: #{tpu_custom_call.1} parent=1 // pred_check_branch
      %69 = sbr.rel (0) target = $region29
    $region28: #{tpu_custom_call.1} parent=1 // pred_region
      _
    $region29: #{tpu_custom_call.1} parent=1 // pred_fallthru
      _
    // Predicated region
    $region30: #{tpu_custom_call.1} parent=1 // pred_check
      _
    $region31: #{tpu_custom_call.1} parent=1 // pred_check_branch
      %71 = sbr.rel (0) target = $region33
    $region32: #{tpu_custom_call.1} parent=1 // pred_region
      %72 = dma.done [#allocation3], 1024
    $region33: #{tpu_custom_call.1} parent=1 // pred_fallthru
      _
    // Predicated region
    $region34: #{tpu_custom_call.1} parent=1 // pred_check
      _
    $region35: #{tpu_custom_call.1} parent=1 // pred_check_branch
      %74 = sbr.rel (0) target = $region37
    $region36: #{tpu_custom_call.1} parent=1 // pred_region
      %75 = dma.done [#allocation6], 16384
    $region37: #{tpu_custom_call.1} parent=1 // pred_fallthru
      _
    // Predicated region
    $region38: #{tpu_custom_call.1} parent=1 // pred_check
      _
    $region39: #{tpu_custom_call.1} parent=1 // pred_check_branch
      %77 = sbr.rel (0) target = $region41
    $region40: #{tpu_custom_call.1} parent=1 // pred_region
      %78 = dma.done [#allocation6], 16384
    $region41: #{tpu_custom_call.1} parent=1 // pred_fallthru
      _
    // Predicated region
    $region42: #{tpu_custom_call.1} parent=1 // pred_check
      _
    $region43: #{tpu_custom_call.1} parent=1 // pred_check_branch
      %80 = sbr.rel (0) target = $region45
    $region44: #{tpu_custom_call.1} parent=1 // pred_region
      %81 = dma.done [#allocation9], 4096
    $region45: #{tpu_custom_call.1} parent=1 // pred_fallthru
      _
    %v83 = vld [vmem:[#allocation2] sm:$0xff]
    %v84 = vld [vmem:[#allocation2 + $0x8] sm:$0xff]
    %v85 = vld [vmem:[#allocation2 + $0x10] sm:$0xff]
    %v86 = vld [vmem:[#allocation2 + $0x18] sm:$0xff]
    %v87 = vld [vmem:[#allocation2 + $0x20] sm:$0xff]
    %v88 = vld [vmem:[#allocation2 + $0x28] sm:$0xff]
    %v89 = vld [vmem:[#allocation2 + $0x30] sm:$0xff]
    %v90 = vld [vmem:[#allocation2 + $0x38] sm:$0xff]
    %v91 = vpack.c.bf16 %v87, %v83
    %v92 = vpack.c.bf16 %v88, %v84
    %v93 = vpack.c.bf16 %v89, %v85
    %v94 = vpack.c.bf16 %v90, %v86
    %v95 = vld [vmem:[#allocation5] sm:$0xff]
    %v96 = vld [vmem:[#allocation5 + $0x8] sm:$0xff]
    %v97 = vld [vmem:[#allocation5 + $0x10] sm:$0xff]
    %v98 = vld [vmem:[#allocation5 + $0x18] sm:$0xff]
    %v99 = vld [vmem:[#allocation5 + $0x20] sm:$0xff]
    %v100 = vld [vmem:[#allocation5 + $0x28] sm:$0xff]
    %v101 = vld [vmem:[#allocation5 + $0x30] sm:$0xff]
    %v102 = vld [vmem:[#allocation5 + $0x38] sm:$0xff]
    %v103 = vld [vmem:[#allocation5 + $0x40] sm:$0xff]
    %v104 = vld [vmem:[#allocation5 + $0x48] sm:$0xff]
    %v105 = vld [vmem:[#allocation5 + $0x50] sm:$0xff]
    %v106 = vld [vmem:[#allocation5 + $0x58] sm:$0xff]
    %v107 = vld [vmem:[#allocation5 + $0x60] sm:$0xff]
    %v108 = vld [vmem:[#allocation5 + $0x68] sm:$0xff]
    %v109 = vld [vmem:[#allocation5 + $0x70] sm:$0xff]
    %v110 = vld [vmem:[#allocation5 + $0x78] sm:$0xff]
    %v111 = vld [vmem:[#allocation5 + $0x80] sm:$0xff]
    %v112 = vld [vmem:[#allocation5 + $0x88] sm:$0xff]
    %v113 = vld [vmem:[#allocation5 + $0x90] sm:$0xff]
    %v114 = vld [vmem:[#allocation5 + $0x98] sm:$0xff]
    %v115 = vld [vmem:[#allocation5 + $0xa0] sm:$0xff]
    %v116 = vld [vmem:[#allocation5 + $0xa8] sm:$0xff]
    %v117 = vld [vmem:[#allocation5 + $0xb0] sm:$0xff]
    %v118 = vld [vmem:[#allocation5 + $0xb8] sm:$0xff]
    %v119 = vld [vmem:[#allocation5 + $0xc0] sm:$0xff]
    %v120 = vld [vmem:[#allocation5 + $0xc8] sm:$0xff]
    %v121 = vld [vmem:[#allocation5 + $0xd0] sm:$0xff]
    %v122 = vld [vmem:[#allocation5 + $0xd8] sm:$0xff]
    %v123 = vld [vmem:[#allocation5 + $0xe0] sm:$0xff]
    %v124 = vld [vmem:[#allocation5 + $0xe8] sm:$0xff]
    %v125 = vld [vmem:[#allocation5 + $0xf0] sm:$0xff]
    %v126 = vld [vmem:[#allocation5 + $0xf8] sm:$0xff]
    %v127 = vld [vmem:[#allocation5 + $0x100] sm:$0xff]
    %v128 = vld [vmem:[#allocation5 + $0x108] sm:$0xff]
    %v129 = vld [vmem:[#allocation5 + $0x110] sm:$0xff]
    %v130 = vld [vmem:[#allocation5 + $0x118] sm:$0xff]
    %v131 = vld [vmem:[#allocation5 + $0x120] sm:$0xff]
    %v132 = vld [vmem:[#allocation5 + $0x128] sm:$0xff]
    %v133 = vld [vmem:[#allocation5 + $0x130] sm:$0xff]
    %v134 = vld [vmem:[#allocation5 + $0x138] sm:$0xff]
    %v135 = vld [vmem:[#allocation5 + $0x140] sm:$0xff]
    %v136 = vld [vmem:[#allocation5 + $0x148] sm:$0xff]
    %v137 = vld [vmem:[#allocation5 + $0x150] sm:$0xff]
    %v138 = vld [vmem:[#allocation5 + $0x158] sm:$0xff]
    %v139 = vld [vmem:[#allocation5 + $0x160] sm:$0xff]
    %v140 = vld [vmem:[#allocation5 + $0x168] sm:$0xff]
    %v141 = vld [vmem:[#allocation5 + $0x170] sm:$0xff]
    %v142 = vld [vmem:[#allocation5 + $0x178] sm:$0xff]
    %v143 = vld [vmem:[#allocation5 + $0x180] sm:$0xff]
    %v144 = vld [vmem:[#allocation5 + $0x188] sm:$0xff]
    %v145 = vld [vmem:[#allocation5 + $0x190] sm:$0xff]
    %v146 = vld [vmem:[#allocation5 + $0x198] sm:$0xff]
    %v147 = vld [vmem:[#allocation5 + $0x1a0] sm:$0xff]
    %v148 = vld [vmem:[#allocation5 + $0x1a8] sm:$0xff]
    %v149 = vld [vmem:[#allocation5 + $0x1b0] sm:$0xff]
    %v150 = vld [vmem:[#allocation5 + $0x1b8] sm:$0xff]
    %v151 = vld [vmem:[#allocation5 + $0x1c0] sm:$0xff]
    %v152 = vld [vmem:[#allocation5 + $0x1c8] sm:$0xff]
    %v153 = vld [vmem:[#allocation5 + $0x1d0] sm:$0xff]
    %v154 = vld [vmem:[#allocation5 + $0x1d8] sm:$0xff]
    %v155 = vld [vmem:[#allocation5 + $0x1e0] sm:$0xff]
    %v156 = vld [vmem:[#allocation5 + $0x1e8] sm:$0xff]
    %v157 = vld [vmem:[#allocation5 + $0x1f0] sm:$0xff]
    %v158 = vld [vmem:[#allocation5 + $0x1f8] sm:$0xff]
    %v159 = vld [vmem:[#allocation5 + $0x200] sm:$0xff]
    %v160 = vld [vmem:[#allocation5 + $0x208] sm:$0xff]
    %v161 = vld [vmem:[#allocation5 + $0x210] sm:$0xff]
    %v162 = vld [vmem:[#allocation5 + $0x218] sm:$0xff]
    %v163 = vld [vmem:[#allocation5 + $0x220] sm:$0xff]
    %v164 = vld [vmem:[#allocation5 + $0x228] sm:$0xff]
    %v165 = vld [vmem:[#allocation5 + $0x230] sm:$0xff]
    %v166 = vld [vmem:[#allocation5 + $0x238] sm:$0xff]
    %v167 = vld [vmem:[#allocation5 + $0x240] sm:$0xff]
    %v168 = vld [vmem:[#allocation5 + $0x248] sm:$0xff]
    %v169 = vld [vmem:[#allocation5 + $0x250] sm:$0xff]
    %v170 = vld [vmem:[#allocation5 + $0x258] sm:$0xff]
    %v171 = vld [vmem:[#allocation5 + $0x260] sm:$0xff]
    %v172 = vld [vmem:[#allocation5 + $0x268] sm:$0xff]
    %v173 = vld [vmem:[#allocation5 + $0x270] sm:$0xff]
    %v174 = vld [vmem:[#allocation5 + $0x278] sm:$0xff]
    %v175 = vld [vmem:[#allocation5 + $0x280] sm:$0xff]
    %v176 = vld [vmem:[#allocation5 + $0x288] sm:$0xff]
    %v177 = vld [vmem:[#allocation5 + $0x290] sm:$0xff]
    %v178 = vld [vmem:[#allocation5 + $0x298] sm:$0xff]
    %v179 = vld [vmem:[#allocation5 + $0x2a0] sm:$0xff]
    %v180 = vld [vmem:[#allocation5 + $0x2a8] sm:$0xff]
    %v181 = vld [vmem:[#allocation5 + $0x2b0] sm:$0xff]
    %v182 = vld [vmem:[#allocation5 + $0x2b8] sm:$0xff]
    %v183 = vld [vmem:[#allocation5 + $0x2c0] sm:$0xff]
    %v184 = vld [vmem:[#allocation5 + $0x2c8] sm:$0xff]
    %v185 = vld [vmem:[#allocation5 + $0x2d0] sm:$0xff]
    %v186 = vld [vmem:[#allocation5 + $0x2d8] sm:$0xff]
    %v187 = vld [vmem:[#allocation5 + $0x2e0] sm:$0xff]
    %v188 = vld [vmem:[#allocation5 + $0x2e8] sm:$0xff]
    %v189 = vld [vmem:[#allocation5 + $0x2f0] sm:$0xff]
    %v190 = vld [vmem:[#allocation5 + $0x2f8] sm:$0xff]
    %v191 = vld [vmem:[#allocation5 + $0x300] sm:$0xff]
    %v192 = vld [vmem:[#allocation5 + $0x308] sm:$0xff]
    %v193 = vld [vmem:[#allocation5 + $0x310] sm:$0xff]
    %v194 = vld [vmem:[#allocation5 + $0x318] sm:$0xff]
    %v195 = vld [vmem:[#allocation5 + $0x320] sm:$0xff]
    %v196 = vld [vmem:[#allocation5 + $0x328] sm:$0xff]
    %v197 = vld [vmem:[#allocation5 + $0x330] sm:$0xff]
    %v198 = vld [vmem:[#allocation5 + $0x338] sm:$0xff]
    %v199 = vld [vmem:[#allocation5 + $0x340] sm:$0xff]
    %v200 = vld [vmem:[#allocation5 + $0x348] sm:$0xff]
    %v201 = vld [vmem:[#allocation5 + $0x350] sm:$0xff]
    %v202 = vld [vmem:[#allocation5 + $0x358] sm:$0xff]
    %v203 = vld [vmem:[#allocation5 + $0x360] sm:$0xff]
    %v204 = vld [vmem:[#allocation5 + $0x368] sm:$0xff]
    %v205 = vld [vmem:[#allocation5 + $0x370] sm:$0xff]
    %v206 = vld [vmem:[#allocation5 + $0x378] sm:$0xff]
    %v207 = vld [vmem:[#allocation5 + $0x380] sm:$0xff]
    %v208 = vld [vmem:[#allocation5 + $0x388] sm:$0xff]
    %v209 = vld [vmem:[#allocation5 + $0x390] sm:$0xff]
    %v210 = vld [vmem:[#allocation5 + $0x398] sm:$0xff]
    %v211 = vld [vmem:[#allocation5 + $0x3a0] sm:$0xff]
    %v212 = vld [vmem:[#allocation5 + $0x3a8] sm:$0xff]
    %v213 = vld [vmem:[#allocation5 + $0x3b0] sm:$0xff]
    %v214 = vld [vmem:[#allocation5 + $0x3b8] sm:$0xff]
    %v215 = vld [vmem:[#allocation5 + $0x3c0] sm:$0xff]
    %v216 = vld [vmem:[#allocation5 + $0x3c8] sm:$0xff]
    %v217 = vld [vmem:[#allocation5 + $0x3d0] sm:$0xff]
    %v218 = vld [vmem:[#allocation5 + $0x3d8] sm:$0xff]
    %v219 = vld [vmem:[#allocation5 + $0x3e0] sm:$0xff]
    %v220 = vld [vmem:[#allocation5 + $0x3e8] sm:$0xff]
    %v221 = vld [vmem:[#allocation5 + $0x3f0] sm:$0xff]
    %v222 = vld [vmem:[#allocation5 + $0x3f8] sm:$0xff]
    %v223 = vld [vmem:[%s2] sm:$0xf]
    %v225 = vlaneseq
    %v226 = vshrl.u32 %v225, 7
    %v227 = vsub.s32 0, %v226
    %v228 = vrot.slane %v223, %v227
    %v229 = vlaneseq
    %v230 = vshrl.u32 %v229, 7
    %v231 = vsub.s32 1, %v230
    %v232 = vrot.slane %v223, %v231
    %v233 = vlaneseq
    %v234 = vshrl.u32 %v233, 7
    %v235 = vsub.s32 2, %v234
    %v236 = vrot.slane %v223, %v235
    %v237 = vlaneseq
    %v238 = vshrl.u32 %v237, 7
    %v239 = vsub.s32 3, %v238
    %v240 = vrot.slane %v223, %v239
    %v373 = vunpack.c.l.b16 %v95
    %v374 = vunpack.c.h.b16 %v95
    %v375 = vunpack.c.l.b16 %v96
    %v376 = vunpack.c.h.b16 %v96
    %v377 = vunpack.c.l.b16 %v97
    %v378 = vunpack.c.h.b16 %v97
    %v379 = vunpack.c.l.b16 %v98
    %v380 = vunpack.c.h.b16 %v98
    %v381 = vunpack.c.l.b16 %v99
    %v382 = vunpack.c.h.b16 %v99
    %v383 = vunpack.c.l.b16 %v100
    %v384 = vunpack.c.h.b16 %v100
    %v385 = vunpack.c.l.b16 %v101
    %v386 = vunpack.c.h.b16 %v101
    %v387 = vunpack.c.l.b16 %v102
    %v388 = vunpack.c.h.b16 %v102
    %v389 = vunpack.c.l.b16 %v103
    %v390 = vunpack.c.h.b16 %v103
    %v391 = vunpack.c.l.b16 %v104
    %v392 = vunpack.c.h.b16 %v104
    %v393 = vunpack.c.l.b16 %v105
    %v394 = vunpack.c.h.b16 %v105
    %v395 = vunpack.c.l.b16 %v106
    %v396 = vunpack.c.h.b16 %v106
    %v397 = vunpack.c.l.b16 %v107
    %v398 = vunpack.c.h.b16 %v107
    %v399 = vunpack.c.l.b16 %v108
    %v400 = vunpack.c.h.b16 %v108
    %v401 = vunpack.c.l.b16 %v109
    %v402 = vunpack.c.h.b16 %v109
    %v403 = vunpack.c.l.b16 %v110
    %v404 = vunpack.c.h.b16 %v110
    %v405 = vunpack.c.l.b16 %v111
    %v406 = vunpack.c.h.b16 %v111
    %v407 = vunpack.c.l.b16 %v112
    %v408 = vunpack.c.h.b16 %v112
    %v409 = vunpack.c.l.b16 %v113
    %v410 = vunpack.c.h.b16 %v113
    %v411 = vunpack.c.l.b16 %v114
    %v412 = vunpack.c.h.b16 %v114
    %v413 = vunpack.c.l.b16 %v115
    %v414 = vunpack.c.h.b16 %v115
    %v415 = vunpack.c.l.b16 %v116
    %v416 = vunpack.c.h.b16 %v116
    %v417 = vunpack.c.l.b16 %v117
    %v418 = vunpack.c.h.b16 %v117
    %v419 = vunpack.c.l.b16 %v118
    %v420 = vunpack.c.h.b16 %v118
    %v421 = vunpack.c.l.b16 %v119
    %v422 = vunpack.c.h.b16 %v119
    %v423 = vunpack.c.l.b16 %v120
    %v424 = vunpack.c.h.b16 %v120
    %v425 = vunpack.c.l.b16 %v121
    %v426 = vunpack.c.h.b16 %v121
    %v427 = vunpack.c.l.b16 %v122
    %v428 = vunpack.c.h.b16 %v122
    %v429 = vunpack.c.l.b16 %v123
    %v430 = vunpack.c.h.b16 %v123
    %v431 = vunpack.c.l.b16 %v124
    %v432 = vunpack.c.h.b16 %v124
    %v433 = vunpack.c.l.b16 %v125
    %v434 = vunpack.c.h.b16 %v125
    %v435 = vunpack.c.l.b16 %v126
    %v436 = vunpack.c.h.b16 %v126
    %v437 = vunpack.c.l.b16 %v127
    %v438 = vunpack.c.h.b16 %v127
    %v439 = vunpack.c.l.b16 %v128
    %v440 = vunpack.c.h.b16 %v128
    %v441 = vunpack.c.l.b16 %v129
    %v442 = vunpack.c.h.b16 %v129
    %v443 = vunpack.c.l.b16 %v130
    %v444 = vunpack.c.h.b16 %v130
    %v445 = vunpack.c.l.b16 %v131
    %v446 = vunpack.c.h.b16 %v131
    %v447 = vunpack.c.l.b16 %v132
    %v448 = vunpack.c.h.b16 %v132
    %v449 = vunpack.c.l.b16 %v133
    %v450 = vunpack.c.h.b16 %v133
    %v451 = vunpack.c.l.b16 %v134
    %v452 = vunpack.c.h.b16 %v134
    %v453 = vunpack.c.l.b16 %v135
    %v454 = vunpack.c.h.b16 %v135
    %v455 = vunpack.c.l.b16 %v136
    %v456 = vunpack.c.h.b16 %v136
    %v457 = vunpack.c.l.b16 %v137
    %v458 = vunpack.c.h.b16 %v137
    %v459 = vunpack.c.l.b16 %v138
    %v460 = vunpack.c.h.b16 %v138
    %v461 = vunpack.c.l.b16 %v139
    %v462 = vunpack.c.h.b16 %v139
    %v463 = vunpack.c.l.b16 %v140
    %v464 = vunpack.c.h.b16 %v140
    %v465 = vunpack.c.l.b16 %v141
    %v466 = vunpack.c.h.b16 %v141
    %v467 = vunpack.c.l.b16 %v142
    %v468 = vunpack.c.h.b16 %v142
    %v469 = vunpack.c.l.b16 %v143
    %v470 = vunpack.c.h.b16 %v143
    %v471 = vunpack.c.l.b16 %v144
    %v472 = vunpack.c.h.b16 %v144
    %v473 = vunpack.c.l.b16 %v145
    %v474 = vunpack.c.h.b16 %v145
    %v475 = vunpack.c.l.b16 %v146
    %v476 = vunpack.c.h.b16 %v146
    %v477 = vunpack.c.l.b16 %v147
    %v478 = vunpack.c.h.b16 %v147
    %v479 = vunpack.c.l.b16 %v148
    %v480 = vunpack.c.h.b16 %v148
    %v481 = vunpack.c.l.b16 %v149
    %v482 = vunpack.c.h.b16 %v149
    %v483 = vunpack.c.l.b16 %v150
    %v484 = vunpack.c.h.b16 %v150
    %v485 = vunpack.c.l.b16 %v151
    %v486 = vunpack.c.h.b16 %v151
    %v487 = vunpack.c.l.b16 %v152
    %v488 = vunpack.c.h.b16 %v152
    %v489 = vunpack.c.l.b16 %v153
    %v490 = vunpack.c.h.b16 %v153
    %v491 = vunpack.c.l.b16 %v154
    %v492 = vunpack.c.h.b16 %v154
    %v493 = vunpack.c.l.b16 %v155
    %v494 = vunpack.c.h.b16 %v155
    %v495 = vunpack.c.l.b16 %v156
    %v496 = vunpack.c.h.b16 %v156
    %v497 = vunpack.c.l.b16 %v157
    %v498 = vunpack.c.h.b16 %v157
    %v499 = vunpack.c.l.b16 %v158
    %v500 = vunpack.c.h.b16 %v158
    %v501 = vunpack.c.l.b16 %v159
    %v502 = vunpack.c.h.b16 %v159
    %v503 = vunpack.c.l.b16 %v160
    %v504 = vunpack.c.h.b16 %v160
    %v505 = vunpack.c.l.b16 %v161
    %v506 = vunpack.c.h.b16 %v161
    %v507 = vunpack.c.l.b16 %v162
    %v508 = vunpack.c.h.b16 %v162
    %v509 = vunpack.c.l.b16 %v163
    %v510 = vunpack.c.h.b16 %v163
    %v511 = vunpack.c.l.b16 %v164
    %v512 = vunpack.c.h.b16 %v164
    %v513 = vunpack.c.l.b16 %v165
    %v514 = vunpack.c.h.b16 %v165
    %v515 = vunpack.c.l.b16 %v166
    %v516 = vunpack.c.h.b16 %v166
    %v517 = vunpack.c.l.b16 %v167
    %v518 = vunpack.c.h.b16 %v167
    %v519 = vunpack.c.l.b16 %v168
    %v520 = vunpack.c.h.b16 %v168
    %v521 = vunpack.c.l.b16 %v169
    %v522 = vunpack.c.h.b16 %v169
    %v523 = vunpack.c.l.b16 %v170
    %v524 = vunpack.c.h.b16 %v170
    %v525 = vunpack.c.l.b16 %v171
    %v526 = vunpack.c.h.b16 %v171
    %v527 = vunpack.c.l.b16 %v172
    %v528 = vunpack.c.h.b16 %v172
    %v529 = vunpack.c.l.b16 %v173
    %v530 = vunpack.c.h.b16 %v173
    %v531 = vunpack.c.l.b16 %v174
    %v532 = vunpack.c.h.b16 %v174
    %v533 = vunpack.c.l.b16 %v175
    %v534 = vunpack.c.h.b16 %v175
    %v535 = vunpack.c.l.b16 %v176
    %v536 = vunpack.c.h.b16 %v176
    %v537 = vunpack.c.l.b16 %v177
    %v538 = vunpack.c.h.b16 %v177
    %v539 = vunpack.c.l.b16 %v178
    %v540 = vunpack.c.h.b16 %v178
    %v541 = vunpack.c.l.b16 %v179
    %v542 = vunpack.c.h.b16 %v179
    %v543 = vunpack.c.l.b16 %v180
    %v544 = vunpack.c.h.b16 %v180
    %v545 = vunpack.c.l.b16 %v181
    %v546 = vunpack.c.h.b16 %v181
    %v547 = vunpack.c.l.b16 %v182
    %v548 = vunpack.c.h.b16 %v182
    %v549 = vunpack.c.l.b16 %v183
    %v550 = vunpack.c.h.b16 %v183
    %v551 = vunpack.c.l.b16 %v184
    %v552 = vunpack.c.h.b16 %v184
    %v553 = vunpack.c.l.b16 %v185
    %v554 = vunpack.c.h.b16 %v185
    %v555 = vunpack.c.l.b16 %v186
    %v556 = vunpack.c.h.b16 %v186
    %v557 = vunpack.c.l.b16 %v187
    %v558 = vunpack.c.h.b16 %v187
    %v559 = vunpack.c.l.b16 %v188
    %v560 = vunpack.c.h.b16 %v188
    %v561 = vunpack.c.l.b16 %v189
    %v562 = vunpack.c.h.b16 %v189
    %v563 = vunpack.c.l.b16 %v190
    %v564 = vunpack.c.h.b16 %v190
    %v565 = vunpack.c.l.b16 %v191
    %v566 = vunpack.c.h.b16 %v191
    %v567 = vunpack.c.l.b16 %v192
    %v568 = vunpack.c.h.b16 %v192
    %v569 = vunpack.c.l.b16 %v193
    %v570 = vunpack.c.h.b16 %v193
    %v571 = vunpack.c.l.b16 %v194
    %v572 = vunpack.c.h.b16 %v194
    %v573 = vunpack.c.l.b16 %v195
    %v574 = vunpack.c.h.b16 %v195
    %v575 = vunpack.c.l.b16 %v196
    %v576 = vunpack.c.h.b16 %v196
    %v577 = vunpack.c.l.b16 %v197
    %v578 = vunpack.c.h.b16 %v197
    %v579 = vunpack.c.l.b16 %v198
    %v580 = vunpack.c.h.b16 %v198
    %v581 = vunpack.c.l.b16 %v199
    %v582 = vunpack.c.h.b16 %v199
    %v583 = vunpack.c.l.b16 %v200
    %v584 = vunpack.c.h.b16 %v200
    %v585 = vunpack.c.l.b16 %v201
    %v586 = vunpack.c.h.b16 %v201
    %v587 = vunpack.c.l.b16 %v202
    %v588 = vunpack.c.h.b16 %v202
    %v589 = vunpack.c.l.b16 %v203
    %v590 = vunpack.c.h.b16 %v203
    %v591 = vunpack.c.l.b16 %v204
    %v592 = vunpack.c.h.b16 %v204
    %v593 = vunpack.c.l.b16 %v205
    %v594 = vunpack.c.h.b16 %v205
    %v595 = vunpack.c.l.b16 %v206
    %v596 = vunpack.c.h.b16 %v206
    %v597 = vunpack.c.l.b16 %v207
    %v598 = vunpack.c.h.b16 %v207
    %v599 = vunpack.c.l.b16 %v208
    %v600 = vunpack.c.h.b16 %v208
    %v601 = vunpack.c.l.b16 %v209
    %v602 = vunpack.c.h.b16 %v209
    %v603 = vunpack.c.l.b16 %v210
    %v604 = vunpack.c.h.b16 %v210
    %v605 = vunpack.c.l.b16 %v211
    %v606 = vunpack.c.h.b16 %v211
    %v607 = vunpack.c.l.b16 %v212
    %v608 = vunpack.c.h.b16 %v212
    %v609 = vunpack.c.l.b16 %v213
    %v610 = vunpack.c.h.b16 %v213
    %v611 = vunpack.c.l.b16 %v214
    %v612 = vunpack.c.h.b16 %v214
    %v613 = vunpack.c.l.b16 %v215
    %v614 = vunpack.c.h.b16 %v215
    %v615 = vunpack.c.l.b16 %v216
    %v616 = vunpack.c.h.b16 %v216
    %v617 = vunpack.c.l.b16 %v217
    %v618 = vunpack.c.h.b16 %v217
    %v619 = vunpack.c.l.b16 %v218
    %v620 = vunpack.c.h.b16 %v218
    %v621 = vunpack.c.l.b16 %v219
    %v622 = vunpack.c.h.b16 %v219
    %v623 = vunpack.c.l.b16 %v220
    %v624 = vunpack.c.h.b16 %v220
    %v625 = vunpack.c.l.b16 %v221
    %v626 = vunpack.c.h.b16 %v221
    %v627 = vunpack.c.l.b16 %v222
    %v628 = vunpack.c.h.b16 %v222
    %v629 = vpack.c.b16 %v377, %v373
    %v630 = vpack.c.b16 %v378, %v374
    %v631 = vpack.c.b16 %v379, %v375
    %v632 = vpack.c.b16 %v380, %v376
    %v633 = vpack.c.b16 %v385, %v381
    %v634 = vpack.c.b16 %v386, %v382
    %v635 = vpack.c.b16 %v387, %v383
    %v636 = vpack.c.b16 %v388, %v384
    %v637 = vpack.c.b16 %v393, %v389
    %v638 = vpack.c.b16 %v394, %v390
    %v639 = vpack.c.b16 %v395, %v391
    %v640 = vpack.c.b16 %v396, %v392
    %v641 = vpack.c.b16 %v401, %v397
    %v642 = vpack.c.b16 %v402, %v398
    %v643 = vpack.c.b16 %v403, %v399
    %v644 = vpack.c.b16 %v404, %v400
    %v645 = vpack.c.b16 %v409, %v405
    %v646 = vpack.c.b16 %v410, %v406
    %v647 = vpack.c.b16 %v411, %v407
    %v648 = vpack.c.b16 %v412, %v408
    %v649 = vpack.c.b16 %v417, %v413
    %v650 = vpack.c.b16 %v418, %v414
    %v651 = vpack.c.b16 %v419, %v415
    %v652 = vpack.c.b16 %v420, %v416
    %v653 = vpack.c.b16 %v425, %v421
    %v654 = vpack.c.b16 %v426, %v422
    %v655 = vpack.c.b16 %v427, %v423
    %v656 = vpack.c.b16 %v428, %v424
    %v657 = vpack.c.b16 %v433, %v429
    %v658 = vpack.c.b16 %v434, %v430
    %v659 = vpack.c.b16 %v435, %v431
    %v660 = vpack.c.b16 %v436, %v432
    %v661 = vpack.c.b16 %v441, %v437
    %v662 = vpack.c.b16 %v442, %v438
    %v663 = vpack.c.b16 %v443, %v439
    %v664 = vpack.c.b16 %v444, %v440
    %v665 = vpack.c.b16 %v449, %v445
    %v666 = vpack.c.b16 %v450, %v446
    %v667 = vpack.c.b16 %v451, %v447
    %v668 = vpack.c.b16 %v452, %v448
    %v669 = vpack.c.b16 %v457, %v453
    %v670 = vpack.c.b16 %v458, %v454
    %v671 = vpack.c.b16 %v459, %v455
    %v672 = vpack.c.b16 %v460, %v456
    %v673 = vpack.c.b16 %v465, %v461
    %v674 = vpack.c.b16 %v466, %v462
    %v675 = vpack.c.b16 %v467, %v463
    %v676 = vpack.c.b16 %v468, %v464
    %v677 = vpack.c.b16 %v473, %v469
    %v678 = vpack.c.b16 %v474, %v470
    %v679 = vpack.c.b16 %v475, %v471
    %v680 = vpack.c.b16 %v476, %v472
    %v681 = vpack.c.b16 %v481, %v477
    %v682 = vpack.c.b16 %v482, %v478
    %v683 = vpack.c.b16 %v483, %v479
    %v684 = vpack.c.b16 %v484, %v480
    %v685 = vpack.c.b16 %v489, %v485
    %v686 = vpack.c.b16 %v490, %v486
    %v687 = vpack.c.b16 %v491, %v487
    %v688 = vpack.c.b16 %v492, %v488
    %v689 = vpack.c.b16 %v497, %v493
    %v690 = vpack.c.b16 %v498, %v494
    %v691 = vpack.c.b16 %v499, %v495
    %v692 = vpack.c.b16 %v500, %v496
    %v693 = vpack.c.b16 %v505, %v501
    %v694 = vpack.c.b16 %v506, %v502
    %v695 = vpack.c.b16 %v507, %v503
    %v696 = vpack.c.b16 %v508, %v504
    %v697 = vpack.c.b16 %v513, %v509
    %v698 = vpack.c.b16 %v514, %v510
    %v699 = vpack.c.b16 %v515, %v511
    %v700 = vpack.c.b16 %v516, %v512
    %v701 = vpack.c.b16 %v521, %v517
    %v702 = vpack.c.b16 %v522, %v518
    %v703 = vpack.c.b16 %v523, %v519
    %v704 = vpack.c.b16 %v524, %v520
    %v705 = vpack.c.b16 %v529, %v525
    %v706 = vpack.c.b16 %v530, %v526
    %v707 = vpack.c.b16 %v531, %v527
    %v708 = vpack.c.b16 %v532, %v528
    %v709 = vpack.c.b16 %v537, %v533
    %v710 = vpack.c.b16 %v538, %v534
    %v711 = vpack.c.b16 %v539, %v535
    %v712 = vpack.c.b16 %v540, %v536
    %v713 = vpack.c.b16 %v545, %v541
    %v714 = vpack.c.b16 %v546, %v542
    %v715 = vpack.c.b16 %v547, %v543
    %v716 = vpack.c.b16 %v548, %v544
    %v717 = vpack.c.b16 %v553, %v549
    %v718 = vpack.c.b16 %v554, %v550
    %v719 = vpack.c.b16 %v555, %v551
    %v720 = vpack.c.b16 %v556, %v552
    %v721 = vpack.c.b16 %v561, %v557
    %v722 = vpack.c.b16 %v562, %v558
    %v723 = vpack.c.b16 %v563, %v559
    %v724 = vpack.c.b16 %v564, %v560
    %v725 = vpack.c.b16 %v569, %v565
    %v726 = vpack.c.b16 %v570, %v566
    %v727 = vpack.c.b16 %v571, %v567
    %v728 = vpack.c.b16 %v572, %v568
    %v729 = vpack.c.b16 %v577, %v573
    %v730 = vpack.c.b16 %v578, %v574
    %v731 = vpack.c.b16 %v579, %v575
    %v732 = vpack.c.b16 %v580, %v576
    %v733 = vpack.c.b16 %v585, %v581
    %v734 = vpack.c.b16 %v586, %v582
    %v735 = vpack.c.b16 %v587, %v583
    %v736 = vpack.c.b16 %v588, %v584
    %v737 = vpack.c.b16 %v593, %v589
    %v738 = vpack.c.b16 %v594, %v590
    %v739 = vpack.c.b16 %v595, %v591
    %v740 = vpack.c.b16 %v596, %v592
    %v741 = vpack.c.b16 %v601, %v597
    %v742 = vpack.c.b16 %v602, %v598
    %v743 = vpack.c.b16 %v603, %v599
    %v744 = vpack.c.b16 %v604, %v600
    %v745 = vpack.c.b16 %v609, %v605
    %v746 = vpack.c.b16 %v610, %v606
    %v747 = vpack.c.b16 %v611, %v607
    %v748 = vpack.c.b16 %v612, %v608
    %v749 = vpack.c.b16 %v617, %v613
    %v750 = vpack.c.b16 %v618, %v614
    %v751 = vpack.c.b16 %v619, %v615
    %v752 = vpack.c.b16 %v620, %v616
    %v753 = vpack.c.b16 %v625, %v621
    %v754 = vpack.c.b16 %v626, %v622
    %v755 = vpack.c.b16 %v627, %v623
    %v756 = vpack.c.b16 %v628, %v624
    %885 = vmatprep.subr.bf16.mxu0 %v630
    %886 = vmatpush1.bf16.msra.mxu0 %v629
    %887 = vmatprep.subr.bf16.mxu0 %v634
    %888 = vmatpush1.bf16.msra.mxu0 %v633
    %889 = vmatprep.subr.bf16.mxu0 %v638
    %890 = vmatpush1.bf16.msra.mxu0 %v637
    %891 = vmatprep.subr.bf16.mxu0 %v642
    %892 = vmatpush1.bf16.msra.mxu0 %v641
    %893 = vmatprep.subr.bf16.mxu0 %v646
    %894 = vmatpush1.bf16.msra.mxu0 %v645
    %895 = vmatprep.subr.bf16.mxu0 %v650
    %896 = vmatpush1.bf16.msra.mxu0 %v649
    %897 = vmatprep.subr.bf16.mxu0 %v654
    %898 = vmatpush1.bf16.msra.mxu0 %v653
    %899 = vmatprep.subr.bf16.mxu0 %v658
    %900 = vmatpush1.bf16.msra.mxu0 %v657
    %901 = vmatprep.subr.bf16.mxu0 %v662
    %902 = vmatpush1.bf16.msra.mxu0 %v661
    %903 = vmatprep.subr.bf16.mxu0 %v666
    %904 = vmatpush1.bf16.msra.mxu0 %v665
    %905 = vmatprep.subr.bf16.mxu0 %v670
    %906 = vmatpush1.bf16.msra.mxu0 %v669
    %907 = vmatprep.subr.bf16.mxu0 %v674
    %908 = vmatpush1.bf16.msra.mxu0 %v673
    %909 = vmatprep.subr.bf16.mxu0 %v678
    %910 = vmatpush1.bf16.msra.mxu0 %v677
    %911 = vmatprep.subr.bf16.mxu0 %v682
    %912 = vmatpush1.bf16.msra.mxu0 %v681
    %913 = vmatprep.subr.bf16.mxu0 %v686
    %914 = vmatpush1.bf16.msra.mxu0 %v685
    %915 = vmatprep.subr.bf16.mxu0 %v690
    %916 = vmatpush1.bf16.msra.mxu0 %v689
    %917 = vmatprep.mubr.bf16.mxu0 %v92
    %918 = vmatmul.mubr.bf16.gmra.mrb[0].mxu0 %v91
    %v919 = vpop.f32.mrb[0].mxu0
    %v920 = vadd.f32 %v228, %v919
    %v921 = vpop.f32.mrb[0].mxu0
    %v922 = vadd.f32 %v232, %v921
    %v923 = vpop.f32.mrb[0].mxu0
    %v924 = vadd.f32 %v228, %v923
    %v925 = vpop.f32.mrb[0].mxu0
    %v926 = vadd.f32 %v232, %v925
    %927 = vdwg.mxu0
    %928 = vmatprep.subr.bf16.mxu0 %v694
    %929 = vmatpush1.bf16.msra.mxu0 %v693
    %930 = vmatprep.subr.bf16.mxu0 %v698
    %931 = vmatpush1.bf16.msra.mxu0 %v697
    %932 = vmatprep.subr.bf16.mxu0 %v702
    %933 = vmatpush1.bf16.msra.mxu0 %v701
    %934 = vmatprep.subr.bf16.mxu0 %v706
    %935 = vmatpush1.bf16.msra.mxu0 %v705
    %936 = vmatprep.subr.bf16.mxu0 %v710
    %937 = vmatpush1.bf16.msra.mxu0 %v709
    %938 = vmatprep.subr.bf16.mxu0 %v714
    %939 = vmatpush1.bf16.msra.mxu0 %v713
    %940 = vmatprep.subr.bf16.mxu0 %v718
    %941 = vmatpush1.bf16.msra.mxu0 %v717
    %942 = vmatprep.subr.bf16.mxu0 %v722
    %943 = vmatpush1.bf16.msra.mxu0 %v721
    %944 = vmatprep.subr.bf16.mxu0 %v726
    %945 = vmatpush1.bf16.msra.mxu0 %v725
    %946 = vmatprep.subr.bf16.mxu0 %v730
    %947 = vmatpush1.bf16.msra.mxu0 %v729
    %948 = vmatprep.subr.bf16.mxu0 %v734
    %949 = vmatpush1.bf16.msra.mxu0 %v733
    %950 = vmatprep.subr.bf16.mxu0 %v738
    %951 = vmatpush1.bf16.msra.mxu0 %v737
    %952 = vmatprep.subr.bf16.mxu0 %v742
    %953 = vmatpush1.bf16.msra.mxu0 %v741
    %954 = vmatprep.subr.bf16.mxu0 %v746
    %955 = vmatpush1.bf16.msra.mxu0 %v745
    %956 = vmatprep.subr.bf16.mxu0 %v750
    %957 = vmatpush1.bf16.msra.mxu0 %v749
    %958 = vmatprep.subr.bf16.mxu0 %v754
    %959 = vmatpush1.bf16.msra.mxu0 %v753
    %960 = vmatprep.mubr.bf16.mxu0 %v94
    %961 = vmatmul.mubr.bf16.gmra.mrb[0].mxu0 %v93
    %v962 = vpop.f32.mrb[0].mxu0
    %v963 = vadd.f32 %v920, %v962
    %v964 = vpop.f32.mrb[0].mxu0
    %v965 = vadd.f32 %v922, %v964
    %v966 = vpop.f32.mrb[0].mxu0
    %v967 = vadd.f32 %v924, %v966
    %v968 = vpop.f32.mrb[0].mxu0
    %v969 = vadd.f32 %v926, %v968
    %970 = vdwg.mxu0
    %971 = vmatprep.subr.bf16.mxu0 %v632
    %972 = vmatpush1.bf16.msra.mxu0 %v631
    %973 = vmatprep.subr.bf16.mxu0 %v636
    %974 = vmatpush1.bf16.msra.mxu0 %v635
    %975 = vmatprep.subr.bf16.mxu0 %v640
    %976 = vmatpush1.bf16.msra.mxu0 %v639
    %977 = vmatprep.subr.bf16.mxu0 %v644
    %978 = vmatpush1.bf16.msra.mxu0 %v643
    %979 = vmatprep.subr.bf16.mxu0 %v648
    %980 = vmatpush1.bf16.msra.mxu0 %v647
    %981 = vmatprep.subr.bf16.mxu0 %v652
    %982 = vmatpush1.bf16.msra.mxu0 %v651
    %983 = vmatprep.subr.bf16.mxu0 %v656
    %984 = vmatpush1.bf16.msra.mxu0 %v655
    %985 = vmatprep.subr.bf16.mxu0 %v660
    %986 = vmatpush1.bf16.msra.mxu0 %v659
    %987 = vmatprep.subr.bf16.mxu0 %v664
    %988 = vmatpush1.bf16.msra.mxu0 %v663
    %989 = vmatprep.subr.bf16.mxu0 %v668
    %990 = vmatpush1.bf16.msra.mxu0 %v667
    %991 = vmatprep.subr.bf16.mxu0 %v672
    %992 = vmatpush1.bf16.msra.mxu0 %v671
    %993 = vmatprep.subr.bf16.mxu0 %v676
    %994 = vmatpush1.bf16.msra.mxu0 %v675
    %995 = vmatprep.subr.bf16.mxu0 %v680
    %996 = vmatpush1.bf16.msra.mxu0 %v679
    %997 = vmatprep.subr.bf16.mxu0 %v684
    %998 = vmatpush1.bf16.msra.mxu0 %v683
    %999 = vmatprep.subr.bf16.mxu0 %v688
    %1000 = vmatpush1.bf16.msra.mxu0 %v687
    %1001 = vmatprep.subr.bf16.mxu0 %v692
    %1002 = vmatpush1.bf16.msra.mxu0 %v691
    %1003 = vmatprep.mubr.bf16.mxu0 %v92
    %1004 = vmatmul.mubr.bf16.gmra.mrb[0].mxu0 %v91
    %v1005 = vpop.f32.mrb[0].mxu0
    %v1006 = vadd.f32 %v236, %v1005
    %v1007 = vpop.f32.mrb[0].mxu0
    %v1008 = vadd.f32 %v240, %v1007
    %v1009 = vpop.f32.mrb[0].mxu0
    %v1010 = vadd.f32 %v236, %v1009
    %v1011 = vpop.f32.mrb[0].mxu0
    %v1012 = vadd.f32 %v240, %v1011
    %1013 = vdwg.mxu0
    %1014 = vmatprep.subr.bf16.mxu0 %v696
    %1015 = vmatpush1.bf16.msra.mxu0 %v695
    %1016 = vmatprep.subr.bf16.mxu0 %v700
    %1017 = vmatpush1.bf16.msra.mxu0 %v699
    %1018 = vmatprep.subr.bf16.mxu0 %v704
    %1019 = vmatpush1.bf16.msra.mxu0 %v703
    %1020 = vmatprep.subr.bf16.mxu0 %v708
    %1021 = vmatpush1.bf16.msra.mxu0 %v707
    %1022 = vmatprep.subr.bf16.mxu0 %v712
    %1023 = vmatpush1.bf16.msra.mxu0 %v711
    %1024 = vmatprep.subr.bf16.mxu0 %v716
    %1025 = vmatpush1.bf16.msra.mxu0 %v715
    %1026 = vmatprep.subr.bf16.mxu0 %v720
    %1027 = vmatpush1.bf16.msra.mxu0 %v719
    %1028 = vmatprep.subr.bf16.mxu0 %v724
    %1029 = vmatpush1.bf16.msra.mxu0 %v723
    %1030 = vmatprep.subr.bf16.mxu0 %v728
    %1031 = vmatpush1.bf16.msra.mxu0 %v727
    %1032 = vmatprep.subr.bf16.mxu0 %v732
    %1033 = vmatpush1.bf16.msra.mxu0 %v731
    %1034 = vmatprep.subr.bf16.mxu0 %v736
    %1035 = vmatpush1.bf16.msra.mxu0 %v735
    %1036 = vmatprep.subr.bf16.mxu0 %v740
    %1037 = vmatpush1.bf16.msra.mxu0 %v739
    %1038 = vmatprep.subr.bf16.mxu0 %v744
    %1039 = vmatpush1.bf16.msra.mxu0 %v743
    %1040 = vmatprep.subr.bf16.mxu0 %v748
    %1041 = vmatpush1.bf16.msra.mxu0 %v747
    %1042 = vmatprep.subr.bf16.mxu0 %v752
    %1043 = vmatpush1.bf16.msra.mxu0 %v751
    %1044 = vmatprep.subr.bf16.mxu0 %v756
    %1045 = vmatpush1.bf16.msra.mxu0 %v755
    %1046 = vmatprep.mubr.bf16.mxu0 %v94
    %1047 = vmatmul.mubr.bf16.gmra.mrb[0].mxu0 %v93
    %v1048 = vpop.f32.mrb[0].mxu0
    %v1049 = vadd.f32 %v1006, %v1048
    %v1050 = vpop.f32.mrb[0].mxu0
    %v1051 = vadd.f32 %v1008, %v1050
    %v1052 = vpop.f32.mrb[0].mxu0
    %v1053 = vadd.f32 %v1010, %v1052
    %v1054 = vpop.f32.mrb[0].mxu0
    %v1055 = vadd.f32 %v1012, %v1054
    %1056 = vdwg.mxu0
    %v1057 = vmax.f32 %v963, 0.0
    %v1058 = vmax.f32 %v965, 0.0
    %v1059 = vmax.f32 %v1049, 0.0
    %v1060 = vmax.f32 %v1051, 0.0
    %v1061 = vmax.f32 %v967, 0.0
    %v1062 = vmax.f32 %v969, 0.0
    %v1063 = vmax.f32 %v1053, 0.0
    %v1064 = vmax.f32 %v1055, 0.0
    %v1065 = vpack.c.bf16 %v1061, %v1057
    %v1066 = vpack.c.bf16 %v1062, %v1058
    %v1067 = vpack.c.bf16 %v1063, %v1059
    %v1068 = vpack.c.bf16 %v1064, %v1060
    %v1069 = vld [vmem:[#allocation7] sm:$0xff]
    %v1070 = vld [vmem:[#allocation7 + $0x8] sm:$0xff]
    %v1071 = vld [vmem:[#allocation7 + $0x10] sm:$0xff]
    %v1072 = vld [vmem:[#allocation7 + $0x18] sm:$0xff]
    %v1073 = vld [vmem:[#allocation7 + $0x20] sm:$0xff]
    %v1074 = vld [vmem:[#allocation7 + $0x28] sm:$0xff]
    %v1075 = vld [vmem:[#allocation7 + $0x30] sm:$0xff]
    %v1076 = vld [vmem:[#allocation7 + $0x38] sm:$0xff]
    %v1077 = vld [vmem:[#allocation7 + $0x40] sm:$0xff]
    %v1078 = vld [vmem:[#allocation7 + $0x48] sm:$0xff]
    %v1079 = vld [vmem:[#allocation7 + $0x50] sm:$0xff]
    %v1080 = vld [vmem:[#allocation7 + $0x58] sm:$0xff]
    %v1081 = vld [vmem:[#allocation7 + $0x60] sm:$0xff]
    %v1082 = vld [vmem:[#allocation7 + $0x68] sm:$0xff]
    %v1083 = vld [vmem:[#allocation7 + $0x70] sm:$0xff]
    %v1084 = vld [vmem:[#allocation7 + $0x78] sm:$0xff]
    %v1085 = vld [vmem:[#allocation7 + $0x80] sm:$0xff]
    %v1086 = vld [vmem:[#allocation7 + $0x88] sm:$0xff]
    %v1087 = vld [vmem:[#allocation7 + $0x90] sm:$0xff]
    %v1088 = vld [vmem:[#allocation7 + $0x98] sm:$0xff]
    %v1089 = vld [vmem:[#allocation7 + $0xa0] sm:$0xff]
    %v1090 = vld [vmem:[#allocation7 + $0xa8] sm:$0xff]
    %v1091 = vld [vmem:[#allocation7 + $0xb0] sm:$0xff]
    %v1092 = vld [vmem:[#allocation7 + $0xb8] sm:$0xff]
    %v1093 = vld [vmem:[#allocation7 + $0xc0] sm:$0xff]
    %v1094 = vld [vmem:[#allocation7 + $0xc8] sm:$0xff]
    %v1095 = vld [vmem:[#allocation7 + $0xd0] sm:$0xff]
    %v1096 = vld [vmem:[#allocation7 + $0xd8] sm:$0xff]
    %v1097 = vld [vmem:[#allocation7 + $0xe0] sm:$0xff]
    %v1098 = vld [vmem:[#allocation7 + $0xe8] sm:$0xff]
    %v1099 = vld [vmem:[#allocation7 + $0xf0] sm:$0xff]
    %v1100 = vld [vmem:[#allocation7 + $0xf8] sm:$0xff]
    %v1101 = vld [vmem:[#allocation7 + $0x100] sm:$0xff]
    %v1102 = vld [vmem:[#allocation7 + $0x108] sm:$0xff]
    %v1103 = vld [vmem:[#allocation7 + $0x110] sm:$0xff]
    %v1104 = vld [vmem:[#allocation7 + $0x118] sm:$0xff]
    %v1105 = vld [vmem:[#allocation7 + $0x120] sm:$0xff]
    %v1106 = vld [vmem:[#allocation7 + $0x128] sm:$0xff]
    %v1107 = vld [vmem:[#allocation7 + $0x130] sm:$0xff]
    %v1108 = vld [vmem:[#allocation7 + $0x138] sm:$0xff]
    %v1109 = vld [vmem:[#allocation7 + $0x140] sm:$0xff]
    %v1110 = vld [vmem:[#allocation7 + $0x148] sm:$0xff]
    %v1111 = vld [vmem:[#allocation7 + $0x150] sm:$0xff]
    %v1112 = vld [vmem:[#allocation7 + $0x158] sm:$0xff]
    %v1113 = vld [vmem:[#allocation7 + $0x160] sm:$0xff]
    %v1114 = vld [vmem:[#allocation7 + $0x168] sm:$0xff]
    %v1115 = vld [vmem:[#allocation7 + $0x170] sm:$0xff]
    %v1116 = vld [vmem:[#allocation7 + $0x178] sm:$0xff]
    %v1117 = vld [vmem:[#allocation7 + $0x180] sm:$0xff]
    %v1118 = vld [vmem:[#allocation7 + $0x188] sm:$0xff]
    %v1119 = vld [vmem:[#allocation7 + $0x190] sm:$0xff]
    %v1120 = vld [vmem:[#allocation7 + $0x198] sm:$0xff]
    %v1121 = vld [vmem:[#allocation7 + $0x1a0] sm:$0xff]
    %v1122 = vld [vmem:[#allocation7 + $0x1a8] sm:$0xff]
    %v1123 = vld [vmem:[#allocation7 + $0x1b0] sm:$0xff]
    %v1124 = vld [vmem:[#allocation7 + $0x1b8] sm:$0xff]
    %v1125 = vld [vmem:[#allocation7 + $0x1c0] sm:$0xff]
    %v1126 = vld [vmem:[#allocation7 + $0x1c8] sm:$0xff]
    %v1127 = vld [vmem:[#allocation7 + $0x1d0] sm:$0xff]
    %v1128 = vld [vmem:[#allocation7 + $0x1d8] sm:$0xff]
    %v1129 = vld [vmem:[#allocation7 + $0x1e0] sm:$0xff]
    %v1130 = vld [vmem:[#allocation7 + $0x1e8] sm:$0xff]
    %v1131 = vld [vmem:[#allocation7 + $0x1f0] sm:$0xff]
    %v1132 = vld [vmem:[#allocation7 + $0x1f8] sm:$0xff]
    %v1133 = vld [vmem:[#allocation7 + $0x200] sm:$0xff]
    %v1134 = vld [vmem:[#allocation7 + $0x208] sm:$0xff]
    %v1135 = vld [vmem:[#allocation7 + $0x210] sm:$0xff]
    %v1136 = vld [vmem:[#allocation7 + $0x218] sm:$0xff]
    %v1137 = vld [vmem:[#allocation7 + $0x220] sm:$0xff]
    %v1138 = vld [vmem:[#allocation7 + $0x228] sm:$0xff]
    %v1139 = vld [vmem:[#allocation7 + $0x230] sm:$0xff]
    %v1140 = vld [vmem:[#allocation7 + $0x238] sm:$0xff]
    %v1141 = vld [vmem:[#allocation7 + $0x240] sm:$0xff]
    %v1142 = vld [vmem:[#allocation7 + $0x248] sm:$0xff]
    %v1143 = vld [vmem:[#allocation7 + $0x250] sm:$0xff]
    %v1144 = vld [vmem:[#allocation7 + $0x258] sm:$0xff]
    %v1145 = vld [vmem:[#allocation7 + $0x260] sm:$0xff]
    %v1146 = vld [vmem:[#allocation7 + $0x268] sm:$0xff]
    %v1147 = vld [vmem:[#allocation7 + $0x270] sm:$0xff]
    %v1148 = vld [vmem:[#allocation7 + $0x278] sm:$0xff]
    %v1149 = vld [vmem:[#allocation7 + $0x280] sm:$0xff]
    %v1150 = vld [vmem:[#allocation7 + $0x288] sm:$0xff]
    %v1151 = vld [vmem:[#allocation7 + $0x290] sm:$0xff]
    %v1152 = vld [vmem:[#allocation7 + $0x298] sm:$0xff]
    %v1153 = vld [vmem:[#allocation7 + $0x2a0] sm:$0xff]
    %v1154 = vld [vmem:[#allocation7 + $0x2a8] sm:$0xff]
    %v1155 = vld [vmem:[#allocation7 + $0x2b0] sm:$0xff]
    %v1156 = vld [vmem:[#allocation7 + $0x2b8] sm:$0xff]
    %v1157 = vld [vmem:[#allocation7 + $0x2c0] sm:$0xff]
    %v1158 = vld [vmem:[#allocation7 + $0x2c8] sm:$0xff]
    %v1159 = vld [vmem:[#allocation7 + $0x2d0] sm:$0xff]
    %v1160 = vld [vmem:[#allocation7 + $0x2d8] sm:$0xff]
    %v1161 = vld [vmem:[#allocation7 + $0x2e0] sm:$0xff]
    %v1162 = vld [vmem:[#allocation7 + $0x2e8] sm:$0xff]
    %v1163 = vld [vmem:[#allocation7 + $0x2f0] sm:$0xff]
    %v1164 = vld [vmem:[#allocation7 + $0x2f8] sm:$0xff]
    %v1165 = vld [vmem:[#allocation7 + $0x300] sm:$0xff]
    %v1166 = vld [vmem:[#allocation7 + $0x308] sm:$0xff]
    %v1167 = vld [vmem:[#allocation7 + $0x310] sm:$0xff]
    %v1168 = vld [vmem:[#allocation7 + $0x318] sm:$0xff]
    %v1169 = vld [vmem:[#allocation7 + $0x320] sm:$0xff]
    %v1170 = vld [vmem:[#allocation7 + $0x328] sm:$0xff]
    %v1171 = vld [vmem:[#allocation7 + $0x330] sm:$0xff]
    %v1172 = vld [vmem:[#allocation7 + $0x338] sm:$0xff]
    %v1173 = vld [vmem:[#allocation7 + $0x340] sm:$0xff]
    %v1174 = vld [vmem:[#allocation7 + $0x348] sm:$0xff]
    %v1175 = vld [vmem:[#allocation7 + $0x350] sm:$0xff]
    %v1176 = vld [vmem:[#allocation7 + $0x358] sm:$0xff]
    %v1177 = vld [vmem:[#allocation7 + $0x360] sm:$0xff]
    %v1178 = vld [vmem:[#allocation7 + $0x368] sm:$0xff]
    %v1179 = vld [vmem:[#allocation7 + $0x370] sm:$0xff]
    %v1180 = vld [vmem:[#allocation7 + $0x378] sm:$0xff]
    %v1181 = vld [vmem:[#allocation7 + $0x380] sm:$0xff]
    %v1182 = vld [vmem:[#allocation7 + $0x388] sm:$0xff]
    %v1183 = vld [vmem:[#allocation7 + $0x390] sm:$0xff]
    %v1184 = vld [vmem:[#allocation7 + $0x398] sm:$0xff]
    %v1185 = vld [vmem:[#allocation7 + $0x3a0] sm:$0xff]
    %v1186 = vld [vmem:[#allocation7 + $0x3a8] sm:$0xff]
    %v1187 = vld [vmem:[#allocation7 + $0x3b0] sm:$0xff]
    %v1188 = vld [vmem:[#allocation7 + $0x3b8] sm:$0xff]
    %v1189 = vld [vmem:[#allocation7 + $0x3c0] sm:$0xff]
    %v1190 = vld [vmem:[#allocation7 + $0x3c8] sm:$0xff]
    %v1191 = vld [vmem:[#allocation7 + $0x3d0] sm:$0xff]
    %v1192 = vld [vmem:[#allocation7 + $0x3d8] sm:$0xff]
    %v1193 = vld [vmem:[#allocation7 + $0x3e0] sm:$0xff]
    %v1194 = vld [vmem:[#allocation7 + $0x3e8] sm:$0xff]
    %v1195 = vld [vmem:[#allocation7 + $0x3f0] sm:$0xff]
    %v1196 = vld [vmem:[#allocation7 + $0x3f8] sm:$0xff]
    %v1197 = vld [vmem:[%s4] sm:$0xf]
    %v1199 = vlaneseq
    %v1200 = vshrl.u32 %v1199, 7
    %v1201 = vsub.s32 0, %v1200
    %v1202 = vrot.slane %v1197, %v1201
    %v1203 = vlaneseq
    %v1204 = vshrl.u32 %v1203, 7
    %v1205 = vsub.s32 1, %v1204
    %v1206 = vrot.slane %v1197, %v1205
    %v1207 = vlaneseq
    %v1208 = vshrl.u32 %v1207, 7
    %v1209 = vsub.s32 2, %v1208
    %v1210 = vrot.slane %v1197, %v1209
    %v1211 = vlaneseq
    %v1212 = vshrl.u32 %v1211, 7
    %v1213 = vsub.s32 3, %v1212
    %v1214 = vrot.slane %v1197, %v1213
    %v1347 = vunpack.c.l.b16 %v1069
    %v1348 = vunpack.c.h.b16 %v1069
    %v1349 = vunpack.c.l.b16 %v1070
    %v1350 = vunpack.c.h.b16 %v1070
    %v1351 = vunpack.c.l.b16 %v1071
    %v1352 = vunpack.c.h.b16 %v1071
    %v1353 = vunpack.c.l.b16 %v1072
    %v1354 = vunpack.c.h.b16 %v1072
    %v1355 = vunpack.c.l.b16 %v1073
    %v1356 = vunpack.c.h.b16 %v1073
    %v1357 = vunpack.c.l.b16 %v1074
    %v1358 = vunpack.c.h.b16 %v1074
    %v1359 = vunpack.c.l.b16 %v1075
    %v1360 = vunpack.c.h.b16 %v1075
    %v1361 = vunpack.c.l.b16 %v1076
    %v1362 = vunpack.c.h.b16 %v1076
    %v1363 = vunpack.c.l.b16 %v1077
    %v1364 = vunpack.c.h.b16 %v1077
    %v1365 = vunpack.c.l.b16 %v1078
    %v1366 = vunpack.c.h.b16 %v1078
    %v1367 = vunpack.c.l.b16 %v1079
    %v1368 = vunpack.c.h.b16 %v1079
    %v1369 = vunpack.c.l.b16 %v1080
    %v1370 = vunpack.c.h.b16 %v1080
    %v1371 = vunpack.c.l.b16 %v1081
    %v1372 = vunpack.c.h.b16 %v1081
    %v1373 = vunpack.c.l.b16 %v1082
    %v1374 = vunpack.c.h.b16 %v1082
    %v1375 = vunpack.c.l.b16 %v1083
    %v1376 = vunpack.c.h.b16 %v1083
    %v1377 = vunpack.c.l.b16 %v1084
    %v1378 = vunpack.c.h.b16 %v1084
    %v1379 = vunpack.c.l.b16 %v1085
    %v1380 = vunpack.c.h.b16 %v1085
    %v1381 = vunpack.c.l.b16 %v1086
    %v1382 = vunpack.c.h.b16 %v1086
    %v1383 = vunpack.c.l.b16 %v1087
    %v1384 = vunpack.c.h.b16 %v1087
    %v1385 = vunpack.c.l.b16 %v1088
    %v1386 = vunpack.c.h.b16 %v1088
    %v1387 = vunpack.c.l.b16 %v1089
    %v1388 = vunpack.c.h.b16 %v1089
    %v1389 = vunpack.c.l.b16 %v1090
    %v1390 = vunpack.c.h.b16 %v1090
    %v1391 = vunpack.c.l.b16 %v1091
    %v1392 = vunpack.c.h.b16 %v1091
    %v1393 = vunpack.c.l.b16 %v1092
    %v1394 = vunpack.c.h.b16 %v1092
    %v1395 = vunpack.c.l.b16 %v1093
    %v1396 = vunpack.c.h.b16 %v1093
    %v1397 = vunpack.c.l.b16 %v1094
    %v1398 = vunpack.c.h.b16 %v1094
    %v1399 = vunpack.c.l.b16 %v1095
    %v1400 = vunpack.c.h.b16 %v1095
    %v1401 = vunpack.c.l.b16 %v1096
    %v1402 = vunpack.c.h.b16 %v1096
    %v1403 = vunpack.c.l.b16 %v1097
    %v1404 = vunpack.c.h.b16 %v1097
    %v1405 = vunpack.c.l.b16 %v1098
    %v1406 = vunpack.c.h.b16 %v1098
    %v1407 = vunpack.c.l.b16 %v1099
    %v1408 = vunpack.c.h.b16 %v1099
    %v1409 = vunpack.c.l.b16 %v1100
    %v1410 = vunpack.c.h.b16 %v1100
    %v1411 = vunpack.c.l.b16 %v1101
    %v1412 = vunpack.c.h.b16 %v1101
    %v1413 = vunpack.c.l.b16 %v1102
    %v1414 = vunpack.c.h.b16 %v1102
    %v1415 = vunpack.c.l.b16 %v1103
    %v1416 = vunpack.c.h.b16 %v1103
    %v1417 = vunpack.c.l.b16 %v1104
    %v1418 = vunpack.c.h.b16 %v1104
    %v1419 = vunpack.c.l.b16 %v1105
    %v1420 = vunpack.c.h.b16 %v1105
    %v1421 = vunpack.c.l.b16 %v1106
    %v1422 = vunpack.c.h.b16 %v1106
    %v1423 = vunpack.c.l.b16 %v1107
    %v1424 = vunpack.c.h.b16 %v1107
    %v1425 = vunpack.c.l.b16 %v1108
    %v1426 = vunpack.c.h.b16 %v1108
    %v1427 = vunpack.c.l.b16 %v1109
    %v1428 = vunpack.c.h.b16 %v1109
    %v1429 = vunpack.c.l.b16 %v1110
    %v1430 = vunpack.c.h.b16 %v1110
    %v1431 = vunpack.c.l.b16 %v1111
    %v1432 = vunpack.c.h.b16 %v1111
    %v1433 = vunpack.c.l.b16 %v1112
    %v1434 = vunpack.c.h.b16 %v1112
    %v1435 = vunpack.c.l.b16 %v1113
    %v1436 = vunpack.c.h.b16 %v1113
    %v1437 = vunpack.c.l.b16 %v1114
    %v1438 = vunpack.c.h.b16 %v1114
    %v1439 = vunpack.c.l.b16 %v1115
    %v1440 = vunpack.c.h.b16 %v1115
    %v1441 = vunpack.c.l.b16 %v1116
    %v1442 = vunpack.c.h.b16 %v1116
    %v1443 = vunpack.c.l.b16 %v1117
    %v1444 = vunpack.c.h.b16 %v1117
    %v1445 = vunpack.c.l.b16 %v1118
    %v1446 = vunpack.c.h.b16 %v1118
    %v1447 = vunpack.c.l.b16 %v1119
    %v1448 = vunpack.c.h.b16 %v1119
    %v1449 = vunpack.c.l.b16 %v1120
    %v1450 = vunpack.c.h.b16 %v1120
    %v1451 = vunpack.c.l.b16 %v1121
    %v1452 = vunpack.c.h.b16 %v1121
    %v1453 = vunpack.c.l.b16 %v1122
    %v1454 = vunpack.c.h.b16 %v1122
    %v1455 = vunpack.c.l.b16 %v1123
    %v1456 = vunpack.c.h.b16 %v1123
    %v1457 = vunpack.c.l.b16 %v1124
    %v1458 = vunpack.c.h.b16 %v1124
    %v1459 = vunpack.c.l.b16 %v1125
    %v1460 = vunpack.c.h.b16 %v1125
    %v1461 = vunpack.c.l.b16 %v1126
    %v1462 = vunpack.c.h.b16 %v1126
    %v1463 = vunpack.c.l.b16 %v1127
    %v1464 = vunpack.c.h.b16 %v1127
    %v1465 = vunpack.c.l.b16 %v1128
    %v1466 = vunpack.c.h.b16 %v1128
    %v1467 = vunpack.c.l.b16 %v1129
    %v1468 = vunpack.c.h.b16 %v1129
    %v1469 = vunpack.c.l.b16 %v1130
    %v1470 = vunpack.c.h.b16 %v1130
    %v1471 = vunpack.c.l.b16 %v1131
    %v1472 = vunpack.c.h.b16 %v1131
    %v1473 = vunpack.c.l.b16 %v1132
    %v1474 = vunpack.c.h.b16 %v1132
    %v1475 = vunpack.c.l.b16 %v1133
    %v1476 = vunpack.c.h.b16 %v1133
    %v1477 = vunpack.c.l.b16 %v1134
    %v1478 = vunpack.c.h.b16 %v1134
    %v1479 = vunpack.c.l.b16 %v1135
    %v1480 = vunpack.c.h.b16 %v1135
    %v1481 = vunpack.c.l.b16 %v1136
    %v1482 = vunpack.c.h.b16 %v1136
    %v1483 = vunpack.c.l.b16 %v1137
    %v1484 = vunpack.c.h.b16 %v1137
    %v1485 = vunpack.c.l.b16 %v1138
    %v1486 = vunpack.c.h.b16 %v1138
    %v1487 = vunpack.c.l.b16 %v1139
    %v1488 = vunpack.c.h.b16 %v1139
    %v1489 = vunpack.c.l.b16 %v1140
    %v1490 = vunpack.c.h.b16 %v1140
    %v1491 = vunpack.c.l.b16 %v1141
    %v1492 = vunpack.c.h.b16 %v1141
    %v1493 = vunpack.c.l.b16 %v1142
    %v1494 = vunpack.c.h.b16 %v1142
    %v1495 = vunpack.c.l.b16 %v1143
    %v1496 = vunpack.c.h.b16 %v1143
    %v1497 = vunpack.c.l.b16 %v1144
    %v1498 = vunpack.c.h.b16 %v1144
    %v1499 = vunpack.c.l.b16 %v1145
    %v1500 = vunpack.c.h.b16 %v1145
    %v1501 = vunpack.c.l.b16 %v1146
    %v1502 = vunpack.c.h.b16 %v1146
    %v1503 = vunpack.c.l.b16 %v1147
    %v1504 = vunpack.c.h.b16 %v1147
    %v1505 = vunpack.c.l.b16 %v1148
    %v1506 = vunpack.c.h.b16 %v1148
    %v1507 = vunpack.c.l.b16 %v1149
    %v1508 = vunpack.c.h.b16 %v1149
    %v1509 = vunpack.c.l.b16 %v1150
    %v1510 = vunpack.c.h.b16 %v1150
    %v1511 = vunpack.c.l.b16 %v1151
    %v1512 = vunpack.c.h.b16 %v1151
    %v1513 = vunpack.c.l.b16 %v1152
    %v1514 = vunpack.c.h.b16 %v1152
    %v1515 = vunpack.c.l.b16 %v1153
    %v1516 = vunpack.c.h.b16 %v1153
    %v1517 = vunpack.c.l.b16 %v1154
    %v1518 = vunpack.c.h.b16 %v1154
    %v1519 = vunpack.c.l.b16 %v1155
    %v1520 = vunpack.c.h.b16 %v1155
    %v1521 = vunpack.c.l.b16 %v1156
    %v1522 = vunpack.c.h.b16 %v1156
    %v1523 = vunpack.c.l.b16 %v1157
    %v1524 = vunpack.c.h.b16 %v1157
    %v1525 = vunpack.c.l.b16 %v1158
    %v1526 = vunpack.c.h.b16 %v1158
    %v1527 = vunpack.c.l.b16 %v1159
    %v1528 = vunpack.c.h.b16 %v1159
    %v1529 = vunpack.c.l.b16 %v1160
    %v1530 = vunpack.c.h.b16 %v1160
    %v1531 = vunpack.c.l.b16 %v1161
    %v1532 = vunpack.c.h.b16 %v1161
    %v1533 = vunpack.c.l.b16 %v1162
    %v1534 = vunpack.c.h.b16 %v1162
    %v1535 = vunpack.c.l.b16 %v1163
    %v1536 = vunpack.c.h.b16 %v1163
    %v1537 = vunpack.c.l.b16 %v1164
    %v1538 = vunpack.c.h.b16 %v1164
    %v1539 = vunpack.c.l.b16 %v1165
    %v1540 = vunpack.c.h.b16 %v1165
    %v1541 = vunpack.c.l.b16 %v1166
    %v1542 = vunpack.c.h.b16 %v1166
    %v1543 = vunpack.c.l.b16 %v1167
    %v1544 = vunpack.c.h.b16 %v1167
    %v1545 = vunpack.c.l.b16 %v1168
    %v1546 = vunpack.c.h.b16 %v1168
    %v1547 = vunpack.c.l.b16 %v1169
    %v1548 = vunpack.c.h.b16 %v1169
    %v1549 = vunpack.c.l.b16 %v1170
    %v1550 = vunpack.c.h.b16 %v1170
    %v1551 = vunpack.c.l.b16 %v1171
    %v1552 = vunpack.c.h.b16 %v1171
    %v1553 = vunpack.c.l.b16 %v1172
    %v1554 = vunpack.c.h.b16 %v1172
    %v1555 = vunpack.c.l.b16 %v1173
    %v1556 = vunpack.c.h.b16 %v1173
    %v1557 = vunpack.c.l.b16 %v1174
    %v1558 = vunpack.c.h.b16 %v1174
    %v1559 = vunpack.c.l.b16 %v1175
    %v1560 = vunpack.c.h.b16 %v1175
    %v1561 = vunpack.c.l.b16 %v1176
    %v1562 = vunpack.c.h.b16 %v1176
    %v1563 = vunpack.c.l.b16 %v1177
    %v1564 = vunpack.c.h.b16 %v1177
    %v1565 = vunpack.c.l.b16 %v1178
    %v1566 = vunpack.c.h.b16 %v1178
    %v1567 = vunpack.c.l.b16 %v1179
    %v1568 = vunpack.c.h.b16 %v1179
    %v1569 = vunpack.c.l.b16 %v1180
    %v1570 = vunpack.c.h.b16 %v1180
    %v1571 = vunpack.c.l.b16 %v1181
    %v1572 = vunpack.c.h.b16 %v1181
    %v1573 = vunpack.c.l.b16 %v1182
    %v1574 = vunpack.c.h.b16 %v1182
    %v1575 = vunpack.c.l.b16 %v1183
    %v1576 = vunpack.c.h.b16 %v1183
    %v1577 = vunpack.c.l.b16 %v1184
    %v1578 = vunpack.c.h.b16 %v1184
    %v1579 = vunpack.c.l.b16 %v1185
    %v1580 = vunpack.c.h.b16 %v1185
    %v1581 = vunpack.c.l.b16 %v1186
    %v1582 = vunpack.c.h.b16 %v1186
    %v1583 = vunpack.c.l.b16 %v1187
    %v1584 = vunpack.c.h.b16 %v1187
    %v1585 = vunpack.c.l.b16 %v1188
    %v1586 = vunpack.c.h.b16 %v1188
    %v1587 = vunpack.c.l.b16 %v1189
    %v1588 = vunpack.c.h.b16 %v1189
    %v1589 = vunpack.c.l.b16 %v1190
    %v1590 = vunpack.c.h.b16 %v1190
    %v1591 = vunpack.c.l.b16 %v1191
    %v1592 = vunpack.c.h.b16 %v1191
    %v1593 = vunpack.c.l.b16 %v1192
    %v1594 = vunpack.c.h.b16 %v1192
    %v1595 = vunpack.c.l.b16 %v1193
    %v1596 = vunpack.c.h.b16 %v1193
    %v1597 = vunpack.c.l.b16 %v1194
    %v1598 = vunpack.c.h.b16 %v1194
    %v1599 = vunpack.c.l.b16 %v1195
    %v1600 = vunpack.c.h.b16 %v1195
    %v1601 = vunpack.c.l.b16 %v1196
    %v1602 = vunpack.c.h.b16 %v1196
    %v1603 = vpack.c.b16 %v1351, %v1347
    %v1604 = vpack.c.b16 %v1352, %v1348
    %v1605 = vpack.c.b16 %v1353, %v1349
    %v1606 = vpack.c.b16 %v1354, %v1350
    %v1607 = vpack.c.b16 %v1359, %v1355
    %v1608 = vpack.c.b16 %v1360, %v1356
    %v1609 = vpack.c.b16 %v1361, %v1357
    %v1610 = vpack.c.b16 %v1362, %v1358
    %v1611 = vpack.c.b16 %v1367, %v1363
    %v1612 = vpack.c.b16 %v1368, %v1364
    %v1613 = vpack.c.b16 %v1369, %v1365
    %v1614 = vpack.c.b16 %v1370, %v1366
    %v1615 = vpack.c.b16 %v1375, %v1371
    %v1616 = vpack.c.b16 %v1376, %v1372
    %v1617 = vpack.c.b16 %v1377, %v1373
    %v1618 = vpack.c.b16 %v1378, %v1374
    %v1619 = vpack.c.b16 %v1383, %v1379
    %v1620 = vpack.c.b16 %v1384, %v1380
    %v1621 = vpack.c.b16 %v1385, %v1381
    %v1622 = vpack.c.b16 %v1386, %v1382
    %v1623 = vpack.c.b16 %v1391, %v1387
    %v1624 = vpack.c.b16 %v1392, %v1388
    %v1625 = vpack.c.b16 %v1393, %v1389
    %v1626 = vpack.c.b16 %v1394, %v1390
    %v1627 = vpack.c.b16 %v1399, %v1395
    %v1628 = vpack.c.b16 %v1400, %v1396
    %v1629 = vpack.c.b16 %v1401, %v1397
    %v1630 = vpack.c.b16 %v1402, %v1398
    %v1631 = vpack.c.b16 %v1407, %v1403
    %v1632 = vpack.c.b16 %v1408, %v1404
    %v1633 = vpack.c.b16 %v1409, %v1405
    %v1634 = vpack.c.b16 %v1410, %v1406
    %v1635 = vpack.c.b16 %v1415, %v1411
    %v1636 = vpack.c.b16 %v1416, %v1412
    %v1637 = vpack.c.b16 %v1417, %v1413
    %v1638 = vpack.c.b16 %v1418, %v1414
    %v1639 = vpack.c.b16 %v1423, %v1419
    %v1640 = vpack.c.b16 %v1424, %v1420
    %v1641 = vpack.c.b16 %v1425, %v1421
    %v1642 = vpack.c.b16 %v1426, %v1422
    %v1643 = vpack.c.b16 %v1431, %v1427
    %v1644 = vpack.c.b16 %v1432, %v1428
    %v1645 = vpack.c.b16 %v1433, %v1429
    %v1646 = vpack.c.b16 %v1434, %v1430
    %v1647 = vpack.c.b16 %v1439, %v1435
    %v1648 = vpack.c.b16 %v1440, %v1436
    %v1649 = vpack.c.b16 %v1441, %v1437
    %v1650 = vpack.c.b16 %v1442, %v1438
    %v1651 = vpack.c.b16 %v1447, %v1443
    %v1652 = vpack.c.b16 %v1448, %v1444
    %v1653 = vpack.c.b16 %v1449, %v1445
    %v1654 = vpack.c.b16 %v1450, %v1446
    %v1655 = vpack.c.b16 %v1455, %v1451
    %v1656 = vpack.c.b16 %v1456, %v1452
    %v1657 = vpack.c.b16 %v1457, %v1453
    %v1658 = vpack.c.b16 %v1458, %v1454
    %v1659 = vpack.c.b16 %v1463, %v1459
    %v1660 = vpack.c.b16 %v1464, %v1460
    %v1661 = vpack.c.b16 %v1465, %v1461
    %v1662 = vpack.c.b16 %v1466, %v1462
    %v1663 = vpack.c.b16 %v1471, %v1467
    %v1664 = vpack.c.b16 %v1472, %v1468
    %v1665 = vpack.c.b16 %v1473, %v1469
    %v1666 = vpack.c.b16 %v1474, %v1470
    %v1667 = vpack.c.b16 %v1479, %v1475
    %v1668 = vpack.c.b16 %v1480, %v1476
    %v1669 = vpack.c.b16 %v1481, %v1477
    %v1670 = vpack.c.b16 %v1482, %v1478
    %v1671 = vpack.c.b16 %v1487, %v1483
    %v1672 = vpack.c.b16 %v1488, %v1484
    %v1673 = vpack.c.b16 %v1489, %v1485
    %v1674 = vpack.c.b16 %v1490, %v1486
    %v1675 = vpack.c.b16 %v1495, %v1491
    %v1676 = vpack.c.b16 %v1496, %v1492
    %v1677 = vpack.c.b16 %v1497, %v1493
    %v1678 = vpack.c.b16 %v1498, %v1494
    %v1679 = vpack.c.b16 %v1503, %v1499
    %v1680 = vpack.c.b16 %v1504, %v1500
    %v1681 = vpack.c.b16 %v1505, %v1501
    %v1682 = vpack.c.b16 %v1506, %v1502
    %v1683 = vpack.c.b16 %v1511, %v1507
    %v1684 = vpack.c.b16 %v1512, %v1508
    %v1685 = vpack.c.b16 %v1513, %v1509
    %v1686 = vpack.c.b16 %v1514, %v1510
    %v1687 = vpack.c.b16 %v1519, %v1515
    %v1688 = vpack.c.b16 %v1520, %v1516
    %v1689 = vpack.c.b16 %v1521, %v1517
    %v1690 = vpack.c.b16 %v1522, %v1518
    %v1691 = vpack.c.b16 %v1527, %v1523
    %v1692 = vpack.c.b16 %v1528, %v1524
    %v1693 = vpack.c.b16 %v1529, %v1525
    %v1694 = vpack.c.b16 %v1530, %v1526
    %v1695 = vpack.c.b16 %v1535, %v1531
    %v1696 = vpack.c.b16 %v1536, %v1532
    %v1697 = vpack.c.b16 %v1537, %v1533
    %v1698 = vpack.c.b16 %v1538, %v1534
    %v1699 = vpack.c.b16 %v1543, %v1539
    %v1700 = vpack.c.b16 %v1544, %v1540
    %v1701 = vpack.c.b16 %v1545, %v1541
    %v1702 = vpack.c.b16 %v1546, %v1542
    %v1703 = vpack.c.b16 %v1551, %v1547
    %v1704 = vpack.c.b16 %v1552, %v1548
    %v1705 = vpack.c.b16 %v1553, %v1549
    %v1706 = vpack.c.b16 %v1554, %v1550
    %v1707 = vpack.c.b16 %v1559, %v1555
    %v1708 = vpack.c.b16 %v1560, %v1556
    %v1709 = vpack.c.b16 %v1561, %v1557
    %v1710 = vpack.c.b16 %v1562, %v1558
    %v1711 = vpack.c.b16 %v1567, %v1563
    %v1712 = vpack.c.b16 %v1568, %v1564
    %v1713 = vpack.c.b16 %v1569, %v1565
    %v1714 = vpack.c.b16 %v1570, %v1566
    %v1715 = vpack.c.b16 %v1575, %v1571
    %v1716 = vpack.c.b16 %v1576, %v1572
    %v1717 = vpack.c.b16 %v1577, %v1573
    %v1718 = vpack.c.b16 %v1578, %v1574
    %v1719 = vpack.c.b16 %v1583, %v1579
    %v1720 = vpack.c.b16 %v1584, %v1580
    %v1721 = vpack.c.b16 %v1585, %v1581
    %v1722 = vpack.c.b16 %v1586, %v1582
    %v1723 = vpack.c.b16 %v1591, %v1587
    %v1724 = vpack.c.b16 %v1592, %v1588
    %v1725 = vpack.c.b16 %v1593, %v1589
    %v1726 = vpack.c.b16 %v1594, %v1590
    %v1727 = vpack.c.b16 %v1599, %v1595
    %v1728 = vpack.c.b16 %v1600, %v1596
    %v1729 = vpack.c.b16 %v1601, %v1597
    %v1730 = vpack.c.b16 %v1602, %v1598
    %1859 = vmatprep.subr.bf16.mxu0 %v1604
    %1860 = vmatpush1.bf16.msra.mxu0 %v1603
    %1861 = vmatprep.subr.bf16.mxu0 %v1608
    %1862 = vmatpush1.bf16.msra.mxu0 %v1607
    %1863 = vmatprep.subr.bf16.mxu0 %v1612
    %1864 = vmatpush1.bf16.msra.mxu0 %v1611
    %1865 = vmatprep.subr.bf16.mxu0 %v1616
    %1866 = vmatpush1.bf16.msra.mxu0 %v1615
    %1867 = vmatprep.subr.bf16.mxu0 %v1620
    %1868 = vmatpush1.bf16.msra.mxu0 %v1619
    %1869 = vmatprep.subr.bf16.mxu0 %v1624
    %1870 = vmatpush1.bf16.msra.mxu0 %v1623
    %1871 = vmatprep.subr.bf16.mxu0 %v1628
    %1872 = vmatpush1.bf16.msra.mxu0 %v1627
    %1873 = vmatprep.subr.bf16.mxu0 %v1632
    %1874 = vmatpush1.bf16.msra.mxu0 %v1631
    %1875 = vmatprep.subr.bf16.mxu0 %v1636
    %1876 = vmatpush1.bf16.msra.mxu0 %v1635
    %1877 = vmatprep.subr.bf16.mxu0 %v1640
    %1878 = vmatpush1.bf16.msra.mxu0 %v1639
    %1879 = vmatprep.subr.bf16.mxu0 %v1644
    %1880 = vmatpush1.bf16.msra.mxu0 %v1643
    %1881 = vmatprep.subr.bf16.mxu0 %v1648
    %1882 = vmatpush1.bf16.msra.mxu0 %v1647
    %1883 = vmatprep.subr.bf16.mxu0 %v1652
    %1884 = vmatpush1.bf16.msra.mxu0 %v1651
    %1885 = vmatprep.subr.bf16.mxu0 %v1656
    %1886 = vmatpush1.bf16.msra.mxu0 %v1655
    %1887 = vmatprep.subr.bf16.mxu0 %v1660
    %1888 = vmatpush1.bf16.msra.mxu0 %v1659
    %1889 = vmatprep.subr.bf16.mxu0 %v1664
    %1890 = vmatpush1.bf16.msra.mxu0 %v1663
    %1891 = vmatprep.mubr.bf16.mxu0 %v1066
    %1892 = vmatmul.mubr.bf16.gmra.mrb[0].mxu0 %v1065
    %v1893 = vpop.f32.mrb[0].mxu0
    %v1894 = vadd.f32 %v1202, %v1893
    %v1895 = vpop.f32.mrb[0].mxu0
    %v1896 = vadd.f32 %v1206, %v1895
    %v1897 = vpop.f32.mrb[0].mxu0
    %v1898 = vadd.f32 %v1202, %v1897
    %v1899 = vpop.f32.mrb[0].mxu0
    %v1900 = vadd.f32 %v1206, %v1899
    %1901 = vdwg.mxu0
    %1902 = vmatprep.subr.bf16.mxu0 %v1668
    %1903 = vmatpush1.bf16.msra.mxu0 %v1667
    %1904 = vmatprep.subr.bf16.mxu0 %v1672
    %1905 = vmatpush1.bf16.msra.mxu0 %v1671
    %1906 = vmatprep.subr.bf16.mxu0 %v1676
    %1907 = vmatpush1.bf16.msra.mxu0 %v1675
    %1908 = vmatprep.subr.bf16.mxu0 %v1680
    %1909 = vmatpush1.bf16.msra.mxu0 %v1679
    %1910 = vmatprep.subr.bf16.mxu0 %v1684
    %1911 = vmatpush1.bf16.msra.mxu0 %v1683
    %1912 = vmatprep.subr.bf16.mxu0 %v1688
    %1913 = vmatpush1.bf16.msra.mxu0 %v1687
    %1914 = vmatprep.subr.bf16.mxu0 %v1692
    %1915 = vmatpush1.bf16.msra.mxu0 %v1691
    %1916 = vmatprep.subr.bf16.mxu0 %v1696
    %1917 = vmatpush1.bf16.msra.mxu0 %v1695
    %1918 = vmatprep.subr.bf16.mxu0 %v1700
    %1919 = vmatpush1.bf16.msra.mxu0 %v1699
    %1920 = vmatprep.subr.bf16.mxu0 %v1704
    %1921 = vmatpush1.bf16.msra.mxu0 %v1703
    %1922 = vmatprep.subr.bf16.mxu0 %v1708
    %1923 = vmatpush1.bf16.msra.mxu0 %v1707
    %1924 = vmatprep.subr.bf16.mxu0 %v1712
    %1925 = vmatpush1.bf16.msra.mxu0 %v1711
    %1926 = vmatprep.subr.bf16.mxu0 %v1716
    %1927 = vmatpush1.bf16.msra.mxu0 %v1715
    %1928 = vmatprep.subr.bf16.mxu0 %v1720
    %1929 = vmatpush1.bf16.msra.mxu0 %v1719
    %1930 = vmatprep.subr.bf16.mxu0 %v1724
    %1931 = vmatpush1.bf16.msra.mxu0 %v1723
    %1932 = vmatprep.subr.bf16.mxu0 %v1728
    %1933 = vmatpush1.bf16.msra.mxu0 %v1727
    %1934 = vmatprep.mubr.bf16.mxu0 %v1068
    %1935 = vmatmul.mubr.bf16.gmra.mrb[0].mxu0 %v1067
    %v1936 = vpop.f32.mrb[0].mxu0
    %v1937 = vadd.f32 %v1894, %v1936
    %v1938 = vpop.f32.mrb[0].mxu0
    %v1939 = vadd.f32 %v1896, %v1938
    %v1940 = vpop.f32.mrb[0].mxu0
    %v1941 = vadd.f32 %v1898, %v1940
    %v1942 = vpop.f32.mrb[0].mxu0
    %v1943 = vadd.f32 %v1900, %v1942
    %1944 = vdwg.mxu0
    %1945 = vmatprep.subr.bf16.mxu0 %v1606
    %1946 = vmatpush1.bf16.msra.mxu0 %v1605
    %1947 = vmatprep.subr.bf16.mxu0 %v1610
    %1948 = vmatpush1.bf16.msra.mxu0 %v1609
    %1949 = vmatprep.subr.bf16.mxu0 %v1614
    %1950 = vmatpush1.bf16.msra.mxu0 %v1613
    %1951 = vmatprep.subr.bf16.mxu0 %v1618
    %1952 = vmatpush1.bf16.msra.mxu0 %v1617
    %1953 = vmatprep.subr.bf16.mxu0 %v1622
    %1954 = vmatpush1.bf16.msra.mxu0 %v1621
    %1955 = vmatprep.subr.bf16.mxu0 %v1626
    %1956 = vmatpush1.bf16.msra.mxu0 %v1625
    %1957 = vmatprep.subr.bf16.mxu0 %v1630
    %1958 = vmatpush1.bf16.msra.mxu0 %v1629
    %1959 = vmatprep.subr.bf16.mxu0 %v1634
    %1960 = vmatpush1.bf16.msra.mxu0 %v1633
    %1961 = vmatprep.subr.bf16.mxu0 %v1638
    %1962 = vmatpush1.bf16.msra.mxu0 %v1637
    %1963 = vmatprep.subr.bf16.mxu0 %v1642
    %1964 = vmatpush1.bf16.msra.mxu0 %v1641
    %1965 = vmatprep.subr.bf16.mxu0 %v1646
    %1966 = vmatpush1.bf16.msra.mxu0 %v1645
    %1967 = vmatprep.subr.bf16.mxu0 %v1650
    %1968 = vmatpush1.bf16.msra.mxu0 %v1649
    %1969 = vmatprep.subr.bf16.mxu0 %v1654
    %1970 = vmatpush1.bf16.msra.mxu0 %v1653
    %1971 = vmatprep.subr.bf16.mxu0 %v1658
    %1972 = vmatpush1.bf16.msra.mxu0 %v1657
    %1973 = vmatprep.subr.bf16.mxu0 %v1662
    %1974 = vmatpush1.bf16.msra.mxu0 %v1661
    %1975 = vmatprep.subr.bf16.mxu0 %v1666
    %1976 = vmatpush1.bf16.msra.mxu0 %v1665
    %1977 = vmatprep.mubr.bf16.mxu0 %v1066
    %1978 = vmatmul.mubr.bf16.gmra.mrb[0].mxu0 %v1065
    %v1979 = vpop.f32.mrb[0].mxu0
    %v1980 = vadd.f32 %v1210, %v1979
    %v1981 = vpop.f32.mrb[0].mxu0
    %v1982 = vadd.f32 %v1214, %v1981
    %v1983 = vpop.f32.mrb[0].mxu0
    %v1984 = vadd.f32 %v1210, %v1983
    %v1985 = vpop.f32.mrb[0].mxu0
    %v1986 = vadd.f32 %v1214, %v1985
    %1987 = vdwg.mxu0
    %1988 = vmatprep.subr.bf16.mxu0 %v1670
    %1989 = vmatpush1.bf16.msra.mxu0 %v1669
    %1990 = vmatprep.subr.bf16.mxu0 %v1674
    %1991 = vmatpush1.bf16.msra.mxu0 %v1673
    %1992 = vmatprep.subr.bf16.mxu0 %v1678
    %1993 = vmatpush1.bf16.msra.mxu0 %v1677
    %1994 = vmatprep.subr.bf16.mxu0 %v1682
    %1995 = vmatpush1.bf16.msra.mxu0 %v1681
    %1996 = vmatprep.subr.bf16.mxu0 %v1686
    %1997 = vmatpush1.bf16.msra.mxu0 %v1685
    %1998 = vmatprep.subr.bf16.mxu0 %v1690
    %1999 = vmatpush1.bf16.msra.mxu0 %v1689
    %2000 = vmatprep.subr.bf16.mxu0 %v1694
    %2001 = vmatpush1.bf16.msra.mxu0 %v1693
    %2002 = vmatprep.subr.bf16.mxu0 %v1698
    %2003 = vmatpush1.bf16.msra.mxu0 %v1697
    %2004 = vmatprep.subr.bf16.mxu0 %v1702
    %2005 = vmatpush1.bf16.msra.mxu0 %v1701
    %2006 = vmatprep.subr.bf16.mxu0 %v1706
    %2007 = vmatpush1.bf16.msra.mxu0 %v1705
    %2008 = vmatprep.subr.bf16.mxu0 %v1710
    %2009 = vmatpush1.bf16.msra.mxu0 %v1709
    %2010 = vmatprep.subr.bf16.mxu0 %v1714
    %2011 = vmatpush1.bf16.msra.mxu0 %v1713
    %2012 = vmatprep.subr.bf16.mxu0 %v1718
    %2013 = vmatpush1.bf16.msra.mxu0 %v1717
    %2014 = vmatprep.subr.bf16.mxu0 %v1722
    %2015 = vmatpush1.bf16.msra.mxu0 %v1721
    %2016 = vmatprep.subr.bf16.mxu0 %v1726
    %2017 = vmatpush1.bf16.msra.mxu0 %v1725
    %2018 = vmatprep.subr.bf16.mxu0 %v1730
    %2019 = vmatpush1.bf16.msra.mxu0 %v1729
    %2020 = vmatprep.mubr.bf16.mxu0 %v1068
    %2021 = vmatmul.mubr.bf16.gmra.mrb[0].mxu0 %v1067
    %v2022 = vpop.f32.mrb[0].mxu0
    %v2023 = vadd.f32 %v1980, %v2022
    %v2024 = vpop.f32.mrb[0].mxu0
    %v2025 = vadd.f32 %v1982, %v2024
    %v2026 = vpop.f32.mrb[0].mxu0
    %v2027 = vadd.f32 %v1984, %v2026
    %v2028 = vpop.f32.mrb[0].mxu0
    %v2029 = vadd.f32 %v1986, %v2028
    %2030 = vdwg.mxu0
    %v2031 = vmax.f32 %v1937, 0.0
    %v2032 = vmax.f32 %v1939, 0.0
    %v2033 = vmax.f32 %v2023, 0.0
    %v2034 = vmax.f32 %v2025, 0.0
    %v2035 = vmax.f32 %v1941, 0.0
    %v2036 = vmax.f32 %v1943, 0.0
    %v2037 = vmax.f32 %v2027, 0.0
    %v2038 = vmax.f32 %v2029, 0.0
    %v2039 = vpack.c.bf16 %v2035, %v2031
    %v2040 = vpack.c.bf16 %v2036, %v2032
    %v2041 = vpack.c.bf16 %v2037, %v2033
    %v2042 = vpack.c.bf16 %v2038, %v2034
    %v2043 = vld [vmem:[#allocation8] sm:$0xf]
    %v2044 = vld [vmem:[#allocation8 + $0x4] sm:$0xf]
    %v2045 = vld [vmem:[#allocation8 + $0x8] sm:$0xf]
    %v2046 = vld [vmem:[#allocation8 + $0xc] sm:$0xf]
    %v2047 = vld [vmem:[#allocation8 + $0x10] sm:$0xf]
    %v2048 = vld [vmem:[#allocation8 + $0x14] sm:$0xf]
    %v2049 = vld [vmem:[#allocation8 + $0x18] sm:$0xf]
    %v2050 = vld [vmem:[#allocation8 + $0x1c] sm:$0xf]
    %v2051 = vld [vmem:[#allocation8 + $0x20] sm:$0xf]
    %v2052 = vld [vmem:[#allocation8 + $0x24] sm:$0xf]
    %v2053 = vld [vmem:[#allocation8 + $0x28] sm:$0xf]
    %v2054 = vld [vmem:[#allocation8 + $0x2c] sm:$0xf]
    %v2055 = vld [vmem:[#allocation8 + $0x30] sm:$0xf]
    %v2056 = vld [vmem:[#allocation8 + $0x34] sm:$0xf]
    %v2057 = vld [vmem:[#allocation8 + $0x38] sm:$0xf]
    %v2058 = vld [vmem:[#allocation8 + $0x3c] sm:$0xf]
    %v2059 = vld [vmem:[#allocation8 + $0x40] sm:$0xf]
    %v2060 = vld [vmem:[#allocation8 + $0x44] sm:$0xf]
    %v2061 = vld [vmem:[#allocation8 + $0x48] sm:$0xf]
    %v2062 = vld [vmem:[#allocation8 + $0x4c] sm:$0xf]
    %v2063 = vld [vmem:[#allocation8 + $0x50] sm:$0xf]
    %v2064 = vld [vmem:[#allocation8 + $0x54] sm:$0xf]
    %v2065 = vld [vmem:[#allocation8 + $0x58] sm:$0xf]
    %v2066 = vld [vmem:[#allocation8 + $0x5c] sm:$0xf]
    %v2067 = vld [vmem:[#allocation8 + $0x60] sm:$0xf]
    %v2068 = vld [vmem:[#allocation8 + $0x64] sm:$0xf]
    %v2069 = vld [vmem:[#allocation8 + $0x68] sm:$0xf]
    %v2070 = vld [vmem:[#allocation8 + $0x6c] sm:$0xf]
    %v2071 = vld [vmem:[#allocation8 + $0x70] sm:$0xf]
    %v2072 = vld [vmem:[#allocation8 + $0x74] sm:$0xf]
    %v2073 = vld [vmem:[#allocation8 + $0x78] sm:$0xf]
    %v2074 = vld [vmem:[#allocation8 + $0x7c] sm:$0xf]
    %v2075 = vld [vmem:[#allocation8 + $0x80] sm:$0xf]
    %v2076 = vld [vmem:[#allocation8 + $0x84] sm:$0xf]
    %v2077 = vld [vmem:[#allocation8 + $0x88] sm:$0xf]
    %v2078 = vld [vmem:[#allocation8 + $0x8c] sm:$0xf]
    %v2079 = vld [vmem:[#allocation8 + $0x90] sm:$0xf]
    %v2080 = vld [vmem:[#allocation8 + $0x94] sm:$0xf]
    %v2081 = vld [vmem:[#allocation8 + $0x98] sm:$0xf]
    %v2082 = vld [vmem:[#allocation8 + $0x9c] sm:$0xf]
    %v2083 = vld [vmem:[#allocation8 + $0xa0] sm:$0xf]
    %v2084 = vld [vmem:[#allocation8 + $0xa4] sm:$0xf]
    %v2085 = vld [vmem:[#allocation8 + $0xa8] sm:$0xf]
    %v2086 = vld [vmem:[#allocation8 + $0xac] sm:$0xf]
    %v2087 = vld [vmem:[#allocation8 + $0xb0] sm:$0xf]
    %v2088 = vld [vmem:[#allocation8 + $0xb4] sm:$0xf]
    %v2089 = vld [vmem:[#allocation8 + $0xb8] sm:$0xf]
    %v2090 = vld [vmem:[#allocation8 + $0xbc] sm:$0xf]
    %v2091 = vld [vmem:[#allocation8 + $0xc0] sm:$0xf]
    %v2092 = vld [vmem:[#allocation8 + $0xc4] sm:$0xf]
    %v2093 = vld [vmem:[#allocation8 + $0xc8] sm:$0xf]
    %v2094 = vld [vmem:[#allocation8 + $0xcc] sm:$0xf]
    %v2095 = vld [vmem:[#allocation8 + $0xd0] sm:$0xf]
    %v2096 = vld [vmem:[#allocation8 + $0xd4] sm:$0xf]
    %v2097 = vld [vmem:[#allocation8 + $0xd8] sm:$0xf]
    %v2098 = vld [vmem:[#allocation8 + $0xdc] sm:$0xf]
    %v2099 = vld [vmem:[#allocation8 + $0xe0] sm:$0xf]
    %v2100 = vld [vmem:[#allocation8 + $0xe4] sm:$0xf]
    %v2101 = vld [vmem:[#allocation8 + $0xe8] sm:$0xf]
    %v2102 = vld [vmem:[#allocation8 + $0xec] sm:$0xf]
    %v2103 = vld [vmem:[#allocation8 + $0xf0] sm:$0xf]
    %v2104 = vld [vmem:[#allocation8 + $0xf4] sm:$0xf]
    %v2105 = vld [vmem:[#allocation8 + $0xf8] sm:$0xf]
    %v2106 = vld [vmem:[#allocation8 + $0xfc] sm:$0xf]
    %v2107 = vld [vmem:[%s6] sm:$0x1]
    %v2109 = vlaneseq
    %v2110 = vshrl.u32 %v2109, 7
    %v2111 = vsub.s32 0, %v2110
    %v2112 = vrot.slane %v2107, %v2111
    %v2178 = vunpack.c.l.b16 %v2043
    %v2179 = vunpack.c.l.b16 %v2044
    %v2180 = vunpack.c.l.b16 %v2045
    %v2181 = vunpack.c.l.b16 %v2046
    %v2182 = vunpack.c.l.b16 %v2047
    %v2183 = vunpack.c.l.b16 %v2048
    %v2184 = vunpack.c.l.b16 %v2049
    %v2185 = vunpack.c.l.b16 %v2050
    %v2186 = vunpack.c.l.b16 %v2051
    %v2187 = vunpack.c.l.b16 %v2052
    %v2188 = vunpack.c.l.b16 %v2053
    %v2189 = vunpack.c.l.b16 %v2054
    %v2190 = vunpack.c.l.b16 %v2055
    %v2191 = vunpack.c.l.b16 %v2056
    %v2192 = vunpack.c.l.b16 %v2057
    %v2193 = vunpack.c.l.b16 %v2058
    %v2194 = vunpack.c.l.b16 %v2059
    %v2195 = vunpack.c.l.b16 %v2060
    %v2196 = vunpack.c.l.b16 %v2061
    %v2197 = vunpack.c.l.b16 %v2062
    %v2198 = vunpack.c.l.b16 %v2063
    %v2199 = vunpack.c.l.b16 %v2064
    %v2200 = vunpack.c.l.b16 %v2065
    %v2201 = vunpack.c.l.b16 %v2066
    %v2202 = vunpack.c.l.b16 %v2067
    %v2203 = vunpack.c.l.b16 %v2068
    %v2204 = vunpack.c.l.b16 %v2069
    %v2205 = vunpack.c.l.b16 %v2070
    %v2206 = vunpack.c.l.b16 %v2071
    %v2207 = vunpack.c.l.b16 %v2072
    %v2208 = vunpack.c.l.b16 %v2073
    %v2209 = vunpack.c.l.b16 %v2074
    %v2210 = vunpack.c.l.b16 %v2075
    %v2211 = vunpack.c.l.b16 %v2076
    %v2212 = vunpack.c.l.b16 %v2077
    %v2213 = vunpack.c.l.b16 %v2078
    %v2214 = vunpack.c.l.b16 %v2079
    %v2215 = vunpack.c.l.b16 %v2080
    %v2216 = vunpack.c.l.b16 %v2081
    %v2217 = vunpack.c.l.b16 %v2082
    %v2218 = vunpack.c.l.b16 %v2083
    %v2219 = vunpack.c.l.b16 %v2084
    %v2220 = vunpack.c.l.b16 %v2085
    %v2221 = vunpack.c.l.b16 %v2086
    %v2222 = vunpack.c.l.b16 %v2087
    %v2223 = vunpack.c.l.b16 %v2088
    %v2224 = vunpack.c.l.b16 %v2089
    %v2225 = vunpack.c.l.b16 %v2090
    %v2226 = vunpack.c.l.b16 %v2091
    %v2227 = vunpack.c.l.b16 %v2092
    %v2228 = vunpack.c.l.b16 %v2093
    %v2229 = vunpack.c.l.b16 %v2094
    %v2230 = vunpack.c.l.b16 %v2095
    %v2231 = vunpack.c.l.b16 %v2096
    %v2232 = vunpack.c.l.b16 %v2097
    %v2233 = vunpack.c.l.b16 %v2098
    %v2234 = vunpack.c.l.b16 %v2099
    %v2235 = vunpack.c.l.b16 %v2100
    %v2236 = vunpack.c.l.b16 %v2101
    %v2237 = vunpack.c.l.b16 %v2102
    %v2238 = vunpack.c.l.b16 %v2103
    %v2239 = vunpack.c.l.b16 %v2104
    %v2240 = vunpack.c.l.b16 %v2105
    %v2241 = vunpack.c.l.b16 %v2106
    %v2242 = vpack.c.b16 %v2179, %v2178
    %v2243 = vpack.c.b16 %v2181, %v2180
    %v2244 = vpack.c.b16 %v2183, %v2182
    %v2245 = vpack.c.b16 %v2185, %v2184
    %v2246 = vpack.c.b16 %v2187, %v2186
    %v2247 = vpack.c.b16 %v2189, %v2188
    %v2248 = vpack.c.b16 %v2191, %v2190
    %v2249 = vpack.c.b16 %v2193, %v2192
    %v2250 = vpack.c.b16 %v2195, %v2194
    %v2251 = vpack.c.b16 %v2197, %v2196
    %v2252 = vpack.c.b16 %v2199, %v2198
    %v2253 = vpack.c.b16 %v2201, %v2200
    %v2254 = vpack.c.b16 %v2203, %v2202
    %v2255 = vpack.c.b16 %v2205, %v2204
    %v2256 = vpack.c.b16 %v2207, %v2206
    %v2257 = vpack.c.b16 %v2209, %v2208
    %v2258 = vpack.c.b16 %v2211, %v2210
    %v2259 = vpack.c.b16 %v2213, %v2212
    %v2260 = vpack.c.b16 %v2215, %v2214
    %v2261 = vpack.c.b16 %v2217, %v2216
    %v2262 = vpack.c.b16 %v2219, %v2218
    %v2263 = vpack.c.b16 %v2221, %v2220
    %v2264 = vpack.c.b16 %v2223, %v2222
    %v2265 = vpack.c.b16 %v2225, %v2224
    %v2266 = vpack.c.b16 %v2227, %v2226
    %v2267 = vpack.c.b16 %v2229, %v2228
    %v2268 = vpack.c.b16 %v2231, %v2230
    %v2269 = vpack.c.b16 %v2233, %v2232
    %v2270 = vpack.c.b16 %v2235, %v2234
    %v2271 = vpack.c.b16 %v2237, %v2236
    %v2272 = vpack.c.b16 %v2239, %v2238
    %v2273 = vpack.c.b16 %v2241, %v2240
    %2306 = vmatprep.subr.bf16.mxu0 0
    %2307 = vmatpush1.bf16.msra.mxu0 %v2242
    %2308 = vmatprep.subr.bf16.mxu0 0
    %2309 = vmatpush1.bf16.msra.mxu0 %v2243
    %2310 = vmatprep.subr.bf16.mxu0 0
    %2311 = vmatpush1.bf16.msra.mxu0 %v2244
    %2312 = vmatprep.subr.bf16.mxu0 0
    %2313 = vmatpush1.bf16.msra.mxu0 %v2245
    %2314 = vmatprep.subr.bf16.mxu0 0
    %2315 = vmatpush1.bf16.msra.mxu0 %v2246
    %2316 = vmatprep.subr.bf16.mxu0 0
    %2317 = vmatpush1.bf16.msra.mxu0 %v2247
    %2318 = vmatprep.subr.bf16.mxu0 0
    %2319 = vmatpush1.bf16.msra.mxu0 %v2248
    %2320 = vmatprep.subr.bf16.mxu0 0
    %2321 = vmatpush1.bf16.msra.mxu0 %v2249
    %2322 = vmatprep.subr.bf16.mxu0 0
    %2323 = vmatpush1.bf16.msra.mxu0 %v2250
    %2324 = vmatprep.subr.bf16.mxu0 0
    %2325 = vmatpush1.bf16.msra.mxu0 %v2251
    %2326 = vmatprep.subr.bf16.mxu0 0
    %2327 = vmatpush1.bf16.msra.mxu0 %v2252
    %2328 = vmatprep.subr.bf16.mxu0 0
    %2329 = vmatpush1.bf16.msra.mxu0 %v2253
    %2330 = vmatprep.subr.bf16.mxu0 0
    %2331 = vmatpush1.bf16.msra.mxu0 %v2254
    %2332 = vmatprep.subr.bf16.mxu0 0
    %2333 = vmatpush1.bf16.msra.mxu0 %v2255
    %2334 = vmatprep.subr.bf16.mxu0 0
    %2335 = vmatpush1.bf16.msra.mxu0 %v2256
    %2336 = vmatprep.subr.bf16.mxu0 0
    %2337 = vmatpush1.bf16.msra.mxu0 %v2257
    %2338 = vmatprep.mubr.bf16.mxu0 %v2040
    %2339 = vmatmul.mubr.bf16.gmra.mrb[0].mxu0 %v2039
    %v2340 = vpop.f32.mrb[0].mxu0
    %v2341 = vadd.f32 %v2112, %v2340
    %v2342 = vpop.f32.mrb[0].mxu0
    %v2343 = vpop.f32.mrb[0].mxu0
    %v2344 = vadd.f32 %v2112, %v2343
    %v2345 = vpop.f32.mrb[0].mxu0
    %2346 = vdwg.mxu0
    %2347 = vmatprep.subr.bf16.mxu0 0
    %2348 = vmatpush1.bf16.msra.mxu0 %v2258
    %2349 = vmatprep.subr.bf16.mxu0 0
    %2350 = vmatpush1.bf16.msra.mxu0 %v2259
    %2351 = vmatprep.subr.bf16.mxu0 0
    %2352 = vmatpush1.bf16.msra.mxu0 %v2260
    %2353 = vmatprep.subr.bf16.mxu0 0
    %2354 = vmatpush1.bf16.msra.mxu0 %v2261
    %2355 = vmatprep.subr.bf16.mxu0 0
    %2356 = vmatpush1.bf16.msra.mxu0 %v2262
    %2357 = vmatprep.subr.bf16.mxu0 0
    %2358 = vmatpush1.bf16.msra.mxu0 %v2263
    %2359 = vmatprep.subr.bf16.mxu0 0
    %2360 = vmatpush1.bf16.msra.mxu0 %v2264
    %2361 = vmatprep.subr.bf16.mxu0 0
    %2362 = vmatpush1.bf16.msra.mxu0 %v2265
    %2363 = vmatprep.subr.bf16.mxu0 0
    %2364 = vmatpush1.bf16.msra.mxu0 %v2266
    %2365 = vmatprep.subr.bf16.mxu0 0
    %2366 = vmatpush1.bf16.msra.mxu0 %v2267
    %2367 = vmatprep.subr.bf16.mxu0 0
    %2368 = vmatpush1.bf16.msra.mxu0 %v2268
    %2369 = vmatprep.subr.bf16.mxu0 0
    %2370 = vmatpush1.bf16.msra.mxu0 %v2269
    %2371 = vmatprep.subr.bf16.mxu0 0
    %2372 = vmatpush1.bf16.msra.mxu0 %v2270
    %2373 = vmatprep.subr.bf16.mxu0 0
    %2374 = vmatpush1.bf16.msra.mxu0 %v2271
    %2375 = vmatprep.subr.bf16.mxu0 0
    %2376 = vmatpush1.bf16.msra.mxu0 %v2272
    %2377 = vmatprep.subr.bf16.mxu0 0
    %2378 = vmatpush1.bf16.msra.mxu0 %v2273
    %2379 = vmatprep.mubr.bf16.mxu0 %v2042
    %2380 = vmatmul.mubr.bf16.gmra.mrb[0].mxu0 %v2041
    %v2381 = vpop.f32.mrb[0].mxu0
    %v2382 = vadd.f32 %v2341, %v2381
    %v2383 = vpop.f32.mrb[0].mxu0
    %v2384 = vpop.f32.mrb[0].mxu0
    %v2385 = vadd.f32 %v2344, %v2384
    %v2386 = vpop.f32.mrb[0].mxu0
    %2387 = vdwg.mxu0
    %v2388 = vpack.c.bf16 %v2385, %v2382
    %v2390 = vunpack.c.l.b16 %v2388
    %v2391 = vunpack.c.h.b16 %v2388
    %v2392 = vpack.c.b16 %v2390, %v2390
    %v2393 = vpack.c.b16 %v2391, %v2391
    %2396 = vst [vmem:[#allocation10] sm:$0xf] %v2392
    %2397 = vst [vmem:[#allocation10 + $0x4] sm:$0xf] %v2393
    // Predicated region
    $region46: #{tpu_custom_call.1} parent=1 // pred_check
      _
    $region47: #{tpu_custom_call.1} parent=1 // pred_check_branch
      %2399 = sbr.rel (0) target = $region49
    $region48: #{tpu_custom_call.1} parent=1 // pred_region
      %s2401 = ssub.s32 128, 128
      %2402 = vsyncadd [#allocation4], %s2401
      %s2403 = sshll.u32 [#allocation10], 4
      %s2404 = int_to_ptr.vmem [resolvable:$true] %s2403
      %2409 = dma.vmem_to_hbm [thread:$0]  %s2404, 128, %s7, [#allocation4], 64, 64, 4
    $region49: #{tpu_custom_call.1} parent=1 // pred_fallthru
      _
    // Predicated region
    $region50: #{tpu_custom_call.1} parent=1 // pred_check
      _
    $region51: #{tpu_custom_call.1} parent=1 // pred_check_branch
      %2411 = sbr.rel (0) target = $region53
    $region52: #{tpu_custom_call.1} parent=1 // pred_region
      %2412 = dma.done [#allocation4], 128
    $region53: #{tpu_custom_call.1} parent=1 // pred_fallthru
      _
    %2413 = vsyncpa [#allocation3], 1
    %2414 = vsyncpa [#allocation6], 1
    %2415 = vsyncpa [#allocation9], 1
    %2416 = vsyncpa [#allocation4], 1

</llo_original>
